<compile_context>
chip_gen: v6e
topology: v6e:2x2x1
jax: 0.10.0
libtpu: 0.0.40
codegen_flags: <defaults>
</compile_context>

<pallas_src>
import functools

import jax
import jax.numpy as jnp
from jax import lax
from jax.experimental import pallas as pl
from jax.experimental.pallas import tpu as pltpu


# Flip to jnp.bfloat16 for ~2x MXU throughput on v6e/v7x (f32 accumulation is kept
# via preferred_element_type).  f32 default keeps the strict numerical check below.
MATMUL_DTYPE = jnp.float32


def _round_up(x, m):
    return (x + m - 1) // m * m


def _hint_multiple(x, m):
    # pl.multiple_of is an alignment hint for traced offsets; skip for Python ints.
    return x if isinstance(x, int) else pl.multiple_of(x, m)


def _chunk_loop(n_chunks, body):
    """Run body(c) for c in [0, n_chunks): static call for a single chunk (the
    small-image case), lax.fori_loop otherwise so live ranges stay bounded."""
    if n_chunks == 1:
        body(0)
    else:
        def wrapped(c, carry):
            body(c)
            return carry
        lax.fori_loop(0, n_chunks, wrapped, 0)


def _down_kernel(x_ref, w1_ref, s1_ref, t1_ref, w2_ref, s2_ref, t2_ref,
                 o_ref, pooled_pad, h1pad,
                 *, Hh, Wh, Cin, Cmid, Coutp, rows):
    """One image per grid step.

    x_ref:      (Hh, 2, Wh, 2*Cin)  channels-last input, 2x2 pool window folded
                                    into the row-pair axis / lane axis.
    w1_ref:     (9*Cin, Cmid)       conv1 im2col weights, rows ordered (kh, kw, ci).
    w2_ref:     (9*Cmid, Coutp)     conv2 im2col weights (lane-padded outputs).
    s*/t*:      (1, C)              folded BatchNorm scale / shift (+ conv bias).
    o_ref:      (Hh*Wh, Coutp)      flattened output pixels, lane-dense channels.
    pooled_pad: (Hh+2, Wh+2, Cin)   zero-haloed pooled activations (scratch).
    h1pad:      (Hh+2, Wh+2, Cmid)  zero-haloed conv1 activations (scratch).
    """
    Hp, Wp = Hh + 2, Wh + 2
    n_chunks = Hh // rows

    # Zero only the top/bottom halo rows; the column halo strips are written
    # alongside each interior row chunk below.  Done every grid step so the kernel
    # never depends on scratch persistence across the (parallel) grid.
    pooled_pad[0:1, :, :] = jnp.zeros((1, Wp, Cin), jnp.float32)
    pooled_pad[Hp - 1:Hp, :, :] = jnp.zeros((1, Wp, Cin), jnp.float32)
    h1pad[0:1, :, :] = jnp.zeros((1, Wp, Cmid), jnp.float32)
    h1pad[Hp - 1:Hp, :, :] = jnp.zeros((1, Wp, Cmid), jnp.float32)

    # ---- fused MaxPool2d(2) -> pooled_pad interior -------------------------------
    def pool_chunk(c):
        r0 = _hint_multiple(c * rows, rows)
        xc = x_ref[pl.ds(r0, rows)]                           # (rows, 2, Wh, 2*Cin)
        xm = jnp.maximum(xc[:, 0], xc[:, 1])                  # max over the row pair
        pooled = jnp.maximum(xm[..., :Cin], xm[..., Cin:])    # max over the col pair
        dst = pl.ds(1 + r0, rows)
        pooled_pad[dst, 1:Wh + 1, :] = pooled
        pooled_pad[dst, 0:1, :] = jnp.zeros((rows, 1, Cin), jnp.float32)
        pooled_pad[dst, Wh + 1:Wp, :] = jnp.zeros((rows, Wp - Wh - 1, Cin),
                                                  jnp.float32)
    _chunk_loop(n_chunks, pool_chunk)

    # ---- 3x3 conv (pad=1) as a single im2col matmul per row chunk ---------------
    def conv3x3_chunk(src_pad, w_ref, s_ref, t_ref, r0, cin):
        taps = [src_pad[pl.ds(r0 + kh, rows), kw:kw + Wh, :]
                for kh in range(3) for kw in range(3)]        # 9 x (rows, Wh, cin)
        col = jnp.concatenate(taps, axis=-1)                  # (rows, Wh, 9*cin)
        col = col.reshape(rows * Wh, 9 * cin).astype(MATMUL_DTYPE)
        acc = jnp.dot(col, w_ref[...],
                      preferred_element_type=jnp.float32)     # (rows*Wh, cout)
        return jnp.maximum(acc * s_ref[...] + t_ref[...], 0.0)

    # conv1 + folded BN + ReLU -> h1pad interior
    def conv1_chunk(c):
        r0 = _hint_multiple(c * rows, rows)
        h1 = conv3x3_chunk(pooled_pad, w1_ref, s1_ref, t1_ref, r0, Cin)
        h1 = h1.reshape(rows, Wh, Cmid)
        dst = pl.ds(1 + r0, rows)
        h1pad[dst, 1:Wh + 1, :] = h1
        h1pad[dst, 0:1, :] = jnp.zeros((rows, 1, Cmid), jnp.float32)
        h1pad[dst, Wh + 1:Wp, :] = jnp.zeros((rows, Wp - Wh - 1, Cmid), jnp.float32)
    _chunk_loop(n_chunks, conv1_chunk)
    # TODO(synk): dropout > 0.0 (training mode) would need pltpu.prng_* masking;
    # the module default dropout=0.0 is exactly an identity.

    # conv2 + folded BN + ReLU -> lane-dense output (interior only; no mask/zero-fill)
    def conv2_chunk(c):
        r0 = _hint_multiple(c * rows, rows)
        y = conv3x3_chunk(h1pad, w2_ref, s2_ref, t2_ref, r0, Cmid)
        row0 = _hint_multiple(r0 * Wh, rows * Wh)
        o_ref[pl.ds(row0, rows * Wh), :] = y.astype(o_ref.dtype)
    _chunk_loop(n_chunks, conv2_chunk)


def down_forward(x, params):
    """x: (N, Cin, H, W) NCHW (PyTorch convention). Returns (N, Cout, H//2, W//2)."""
    (w1_oihw, b1, g1, be1, m1, v1, w2_oihw, b2, g2, be2, m2, v2) = params
    eps = 1e-5
    N, Cin, H, W = x.shape
    Cmid = w1_oihw.shape[0]
    Cout = w2_oihw.shape[0]
    assert H % 2 == 0 and W % 2 == 0
    Hh, Wh = H // 2, W // 2

    # Lane-dense output channels: pad to a 128-lane multiple so kernel stores are
    # full-width vst (pad lanes have zero weights/scales -> exact zeros, sliced off).
    Coutp = _round_up(Cout, 128) if Cout <= 128 else _round_up(Cout, 8)

    # Pooled-row chunk size: bounds live vector values inside the kernel.
    rows = Hh if (Hh <= 8 or Hh % 8 != 0) else 8

    # NCHW -> NHWC is interface glue; the reshape after it is free (row-major) and
    # folds the 2x2 pooling window into a row-pair axis + the lane axis.
    xh = jnp.transpose(x, (0, 2, 3, 1)).astype(jnp.float32)
    x5 = xh.reshape(N, Hh, 2, Wh, 2 * Cin)

    # conv weights -> im2col matrices with rows ordered (kh, kw, cin)
    w1m = jnp.transpose(w1_oihw, (2, 3, 1, 0)).reshape(9 * Cin, Cmid)
    w2m = jnp.transpose(w2_oihw, (2, 3, 1, 0)).reshape(9 * Cmid, Cout)
    w2m = jnp.pad(w2m, ((0, 0), (0, Coutp - Cout)))

    # fold eval-mode BatchNorm (+ conv bias) into per-channel scale/shift
    s1v = g1 / jnp.sqrt(v1 + eps)
    t1v = s1v * (b1 - m1) + be1
    s2v = g2 / jnp.sqrt(v2 + eps)
    t2v = s2v * (b2 - m2) + be2
    s2v = jnp.pad(s2v, (0, Coutp - Cout))
    t2v = jnp.pad(t2v, (0, Coutp - Cout))

    w1m = w1m.astype(MATMUL_DTYPE)
    w2m = w2m.astype(MATMUL_DTYPE)

    # per-grid-step VMEM budget (double-buffered pipelined blocks + scratch), with
    # headroom, capped at 64 MiB so the request is valid on v7x as well.
    fp32 = 4
    est = (2 * Hh * 2 * Wh * 2 * Cin * fp32              # input block x2 buffers
           + 2 * Hh * Wh * Coutp * fp32                  # output block x2 buffers
           + (9 * Cin * Cmid + 9 * Cmid * Coutp) * fp32  # weights (resident)
           + (Hh + 2) * (Wh + 2) * (Cin + Cmid) * fp32   # padded scratch
           + 4 * rows * Wh * max(9 * Cin, 9 * Cmid, Coutp) * fp32)  # live chunk vals
    vmem_limit = int(min(64 * 2 ** 20, max(16 * 2 ** 20, 2 * est)))

    kern = functools.partial(_down_kernel, Hh=Hh, Wh=Wh, Cin=Cin, Cmid=Cmid,
                             Coutp=Coutp, rows=rows)

    out_flat = pl.pallas_call(
        kern,
        out_shape=jax.ShapeDtypeStruct((N, Hh * Wh, Coutp), jnp.float32),
        grid=(N,),
        in_specs=[
            pl.BlockSpec((None, Hh, 2, Wh, 2 * Cin), lambda b: (b, 0, 0, 0, 0)),
            pl.BlockSpec((9 * Cin, Cmid), lambda b: (0, 0)),
            pl.BlockSpec((1, Cmid), lambda b: (0, 0)),
            pl.BlockSpec((1, Cmid), lambda b: (0, 0)),
            pl.BlockSpec((9 * Cmid, Coutp), lambda b: (0, 0)),
            pl.BlockSpec((1, Coutp), lambda b: (0, 0)),
            pl.BlockSpec((1, Coutp), lambda b: (0, 0)),
        ],
        out_specs=pl.BlockSpec((None, Hh * Wh, Coutp), lambda b: (b, 0, 0)),
        scratch_shapes=[pltpu.VMEM((Hh + 2, Wh + 2, Cin), jnp.float32),
                        pltpu.VMEM((Hh + 2, Wh + 2, Cmid), jnp.float32)],
        compiler_params=pltpu.CompilerParams(
            dimension_semantics=("parallel",),
            vmem_limit_bytes=vmem_limit),
    )(x5, w1m, s1v.reshape(1, Cmid), t1v.reshape(1, Cmid),
      w2m, s2v.reshape(1, Coutp), t2v.reshape(1, Coutp))

    # drop the lane pad, restore NCHW (layout glue)
    y = out_flat.reshape(N, Hh, Wh, Coutp)[..., :Cout]
    return jnp.transpose(y, (0, 3, 1, 2))


def down_reference(x, params):
    """Pure-JAX reference (NCHW), matching eval-mode Down semantics."""
    (w1, b1, g1, be1, m1, v1, w2, b2, g2, be2, m2, v2) = params
    eps = 1e-5
    pooled = lax.reduce_window(x, -jnp.inf, lax.max,
                               (1, 1, 2, 2), (1, 1, 2, 2), "VALID")

    def conv_bn_relu(z, w, b, g, be, m, v):
        z = lax.conv_general_dilated(
            z, w, (1, 1), "SAME",
            dimension_numbers=("NCHW", "OIHW", "NCHW"),
            precision=lax.Precision.HIGHEST)
        z = z + b[None, :, None, None]
        z = (g[None, :, None, None] * (z - m[None, :, None, None])
             * lax.rsqrt(v + eps)[None, :, None, None] + be[None, :, None, None])
        return jnp.maximum(z, 0.0)

    h = conv_bn_relu(pooled, w1, b1, g1, be1, m1, v1)
    return conv_bn_relu(h, w2, b2, g2, be2, m2, v2)


if __name__ == "__main__":
    key = jax.random.PRNGKey(0)
    N, Cin, H, W = 2, 4, 16, 16
    Cout = 8                       # DoubleConv(in, out): mid channels == out channels

    ks = jax.random.split(key, 5)
    x = jax.random.normal(ks[0], (N, Cin, H, W), jnp.float32)
    w1 = jax.random.normal(ks[1], (Cout, Cin, 3, 3), jnp.float32) * 0.2
    b1 = jax.random.normal(ks[2], (Cout,), jnp.float32) * 0.1
    w2 = jax.random.normal(ks[3], (Cout, Cout, 3, 3), jnp.float32) * 0.2
    b2 = jax.random.normal(ks[4], (Cout,), jnp.float32) * 0.1

    ar = jnp.arange(Cout, dtype=jnp.float32)
    g1, be1, m1, v1 = 1.0 + 0.10 * ar, 0.05 * ar, 0.02 * ar, 1.0 + 0.05 * ar
    g2, be2, m2, v2 = 1.0 + 0.07 * ar, -0.03 * ar, 0.01 * ar, 1.0 + 0.08 * ar

    params = (w1, b1, g1, be1, m1, v1, w2, b2, g2, be2, m2, v2)

    out = jax.block_until_ready(down_forward(x, params))
    ref = jax.block_until_ready(down_reference(x, params))

    assert out.shape == (N, Cout, H // 2, W // 2), out.shape
    max_err = float(jnp.max(jnp.abs(out - ref)))
    assert jnp.allclose(out, ref, atol=2e-3, rtol=2e-3), f"max abs err = {max_err}"
    print("KERNEL_OK")
</pallas_src>

<mosaic_0001>
module attributes {stable_mosaic.version = 11 : i64} {
  func.func @_down_kernel(%arg0: i32, %arg1: memref<1x8x2x8x8xf32, #tpu.memory_space<vmem>>, %arg2: memref<36x8xf32, #tpu.memory_space<vmem>>, %arg3: memref<1x8xf32, #tpu.memory_space<vmem>>, %arg4: memref<1x8xf32, #tpu.memory_space<vmem>>, %arg5: memref<72x128xf32, #tpu.memory_space<vmem>>, %arg6: memref<1x128xf32, #tpu.memory_space<vmem>>, %arg7: memref<1x128xf32, #tpu.memory_space<vmem>>, %arg8: memref<1x64x128xf32, #tpu.memory_space<vmem>>, %arg9: memref<10x10x4xf32, #tpu.memory_space<vmem>>, %arg10: memref<10x10x8xf32, #tpu.memory_space<vmem>>) attributes {dimension_semantics = [#tpu.dimension_semantics<parallel>], iteration_bounds = array<i64: 2>, scalar_prefetch = 0 : i64, scratch_operands = 2 : i64, tpu.core_type = #tpu.core_type<tc>, window_params = [{transform_indices = @transform_0, window_bounds = array<i64: 1, 8, 2, 8, 8>}, {pipeline_mode = #tpu.pipeline_mode<synchronous>, transform_indices = @transform_1, window_bounds = array<i64: 36, 8>}, {pipeline_mode = #tpu.pipeline_mode<synchronous>, transform_indices = @transform_2, window_bounds = array<i64: 1, 8>}, {pipeline_mode = #tpu.pipeline_mode<synchronous>, transform_indices = @transform_3, window_bounds = array<i64: 1, 8>}, {pipeline_mode = #tpu.pipeline_mode<synchronous>, transform_indices = @transform_4, window_bounds = array<i64: 72, 128>}, {pipeline_mode = #tpu.pipeline_mode<synchronous>, transform_indices = @transform_5, window_bounds = array<i64: 1, 128>}, {pipeline_mode = #tpu.pipeline_mode<synchronous>, transform_indices = @transform_6, window_bounds = array<i64: 1, 128>}, {transform_indices = @transform_7, window_bounds = array<i64: 1, 64, 128>}]} {
    %cst = arith.constant 0.000000e+00 : f32
    %0 = vector.broadcast %cst : f32 to vector<1x10x4xf32>
    %c0 = arith.constant 0 : index
    %c0_0 = arith.constant 0 : index
    %c0_1 = arith.constant 0 : index
    %1 = vector.load %arg9[%c0, %c0_0, %c0_1] : memref<10x10x4xf32, #tpu.memory_space<vmem>>, vector<1x10x4xf32>
    tpu.vector_store %arg9[%c0, %c0_0, %c0_1], %0 {strides = array<i32>} : memref<10x10x4xf32, #tpu.memory_space<vmem>>, vector<1x10x4xf32>,
    %cst_2 = arith.constant 0.000000e+00 : f32
    %2 = vector.broadcast %cst_2 : f32 to vector<1x10x4xf32>
    %c9 = arith.constant 9 : index
    %c0_3 = arith.constant 0 : index
    %c0_4 = arith.constant 0 : index
    %3 = vector.load %arg9[%c9, %c0_3, %c0_4] : memref<10x10x4xf32, #tpu.memory_space<vmem>>, vector<1x10x4xf32>
    tpu.vector_store %arg9[%c9, %c0_3, %c0_4], %2 {strides = array<i32>} : memref<10x10x4xf32, #tpu.memory_space<vmem>>, vector<1x10x4xf32>,
    %cst_5 = arith.constant 0.000000e+00 : f32
    %4 = vector.broadcast %cst_5 : f32 to vector<1x10x8xf32>
    %c0_6 = arith.constant 0 : index
    %c0_7 = arith.constant 0 : index
    %c0_8 = arith.constant 0 : index
    %5 = vector.load %arg10[%c0_6, %c0_7, %c0_8] : memref<10x10x8xf32, #tpu.memory_space<vmem>>, vector<1x10x8xf32>
    tpu.vector_store %arg10[%c0_6, %c0_7, %c0_8], %4 {strides = array<i32>} : memref<10x10x8xf32, #tpu.memory_space<vmem>>, vector<1x10x8xf32>,
    %cst_9 = arith.constant 0.000000e+00 : f32
    %6 = vector.broadcast %cst_9 : f32 to vector<1x10x8xf32>
    %c9_10 = arith.constant 9 : index
    %c0_11 = arith.constant 0 : index
    %c0_12 = arith.constant 0 : index
    %7 = vector.load %arg10[%c9_10, %c0_11, %c0_12] : memref<10x10x8xf32, #tpu.memory_space<vmem>>, vector<1x10x8xf32>
    tpu.vector_store %arg10[%c9_10, %c0_11, %c0_12], %6 {strides = array<i32>} : memref<10x10x8xf32, #tpu.memory_space<vmem>>, vector<1x10x8xf32>,
    %c0_13 = arith.constant 0 : index
    %c0_14 = arith.constant 0 : index
    %c0_15 = arith.constant 0 : index
    %c0_16 = arith.constant 0 : index
    %c0_17 = arith.constant 0 : index
    %8 = vector.load %arg1[%c0_13, %c0_14, %c0_15, %c0_16, %c0_17] : memref<1x8x2x8x8xf32, #tpu.memory_space<vmem>>, vector<1x8x2x8x8xf32>
    %9 = vector.shape_cast %8 : vector<1x8x2x8x8xf32> to vector<8x2x8x8xf32>
    %10 = vector.extract_strided_slice %9 {offsets = [0, 0, 0, 0], sizes = [8, 1, 8, 8], strides = [1, 1, 1, 1]} : vector<8x2x8x8xf32> to vector<8x1x8x8xf32>
    %11 = vector.shape_cast %10 : vector<8x1x8x8xf32> to vector<8x8x8xf32>
    %12 = vector.extract_strided_slice %9 {offsets = [0, 1, 0, 0], sizes = [8, 1, 8, 8], strides = [1, 1, 1, 1]} : vector<8x2x8x8xf32> to vector<8x1x8x8xf32>
    %13 = vector.shape_cast %12 : vector<8x1x8x8xf32> to vector<8x8x8xf32>
    %14 = arith.maximumf %11, %13 : vector<8x8x8xf32>
    %15 = vector.extract_strided_slice %14 {offsets = [0, 0, 0], sizes = [8, 8, 4], strides = [1, 1, 1]} : vector<8x8x8xf32> to vector<8x8x4xf32>
    %16 = vector.extract_strided_slice %14 {offsets = [0, 0, 4], sizes = [8, 8, 4], strides = [1, 1, 1]} : vector<8x8x8xf32> to vector<8x8x4xf32>
    %17 = arith.maximumf %15, %16 : vector<8x8x4xf32>
    %c1 = arith.constant 1 : index
    %c1_18 = arith.constant 1 : index
    %c0_19 = arith.constant 0 : index
    %18 = vector.load %arg9[%c1, %c1_18, %c0_19] : memref<10x10x4xf32, #tpu.memory_space<vmem>>, vector<8x8x4xf32>
    tpu.vector_store %arg9[%c1, %c1_18, %c0_19], %17 {strides = array<i32>} : memref<10x10x4xf32, #tpu.memory_space<vmem>>, vector<8x8x4xf32>,
    %cst_20 = arith.constant 0.000000e+00 : f32
    %19 = vector.broadcast %cst_20 : f32 to vector<8x1x4xf32>
    %c1_21 = arith.constant 1 : index
    %c0_22 = arith.constant 0 : index
    %c0_23 = arith.constant 0 : index
    %20 = vector.load %arg9[%c1_21, %c0_22, %c0_23] : memref<10x10x4xf32, #tpu.memory_space<vmem>>, vector<8x1x4xf32>
    tpu.vector_store %arg9[%c1_21, %c0_22, %c0_23], %19 {strides = array<i32>} : memref<10x10x4xf32, #tpu.memory_space<vmem>>, vector<8x1x4xf32>,
    %cst_24 = arith.constant 0.000000e+00 : f32
    %21 = vector.broadcast %cst_24 : f32 to vector<8x1x4xf32>
    %c1_25 = arith.constant 1 : index
    %c9_26 = arith.constant 9 : index
    %c0_27 = arith.constant 0 : index
    %22 = vector.load %arg9[%c1_25, %c9_26, %c0_27] : memref<10x10x4xf32, #tpu.memory_space<vmem>>, vector<8x1x4xf32>
    tpu.vector_store %arg9[%c1_25, %c9_26, %c0_27], %21 {strides = array<i32>} : memref<10x10x4xf32, #tpu.memory_space<vmem>>, vector<8x1x4xf32>,
    %c0_28 = arith.constant 0 : index
    %c0_29 = arith.constant 0 : index
    %c0_30 = arith.constant 0 : index
    %23 = vector.load %arg9[%c0_28, %c0_29, %c0_30] : memref<10x10x4xf32, #tpu.memory_space<vmem>>, vector<8x8x4xf32>
    %c0_31 = arith.constant 0 : index
    %c1_32 = arith.constant 1 : index
    %c0_33 = arith.constant 0 : index
    %24 = vector.load %arg9[%c0_31, %c1_32, %c0_33] : memref<10x10x4xf32, #tpu.memory_space<vmem>>, vector<8x8x4xf32>
    %c0_34 = arith.constant 0 : index
    %c2 = arith.constant 2 : index
    %c0_35 = arith.constant 0 : index
    %25 = vector.load %arg9[%c0_34, %c2, %c0_35] : memref<10x10x4xf32, #tpu.memory_space<vmem>>, vector<8x8x4xf32>
    %c1_36 = arith.constant 1 : index
    %c0_37 = arith.constant 0 : index
    %c0_38 = arith.constant 0 : index
    %26 = vector.load %arg9[%c1_36, %c0_37, %c0_38] : memref<10x10x4xf32, #tpu.memory_space<vmem>>, vector<8x8x4xf32>
    %c1_39 = arith.constant 1 : index
    %c1_40 = arith.constant 1 : index
    %c0_41 = arith.constant 0 : index
    %27 = vector.load %arg9[%c1_39, %c1_40, %c0_41] : memref<10x10x4xf32, #tpu.memory_space<vmem>>, vector<8x8x4xf32>
    %c1_42 = arith.constant 1 : index
    %c2_43 = arith.constant 2 : index
    %c0_44 = arith.constant 0 : index
    %28 = vector.load %arg9[%c1_42, %c2_43, %c0_44] : memref<10x10x4xf32, #tpu.memory_space<vmem>>, vector<8x8x4xf32>
    %c2_45 = arith.constant 2 : index
    %c0_46 = arith.constant 0 : index
    %c0_47 = arith.constant 0 : index
    %29 = vector.load %arg9[%c2_45, %c0_46, %c0_47] : memref<10x10x4xf32, #tpu.memory_space<vmem>>, vector<8x8x4xf32>
    %c2_48 = arith.constant 2 : index
    %c1_49 = arith.constant 1 : index
    %c0_50 = arith.constant 0 : index
    %30 = vector.load %arg9[%c2_48, %c1_49, %c0_50] : memref<10x10x4xf32, #tpu.memory_space<vmem>>, vector<8x8x4xf32>
    %c2_51 = arith.constant 2 : index
    %c2_52 = arith.constant 2 : index
    %c0_53 = arith.constant 0 : index
    %31 = vector.load %arg9[%c2_51, %c2_52, %c0_53] : memref<10x10x4xf32, #tpu.memory_space<vmem>>, vector<8x8x4xf32>
    %32 = tpu.concatenate %23, %24, %25, %26, %27, %28, %29, %30, %31 in 2 : vector<8x8x4xf32>, vector<8x8x4xf32>, vector<8x8x4xf32>, vector<8x8x4xf32>, vector<8x8x4xf32>, vector<8x8x4xf32>, vector<8x8x4xf32>, vector<8x8x4xf32>, vector<8x8x4xf32> -> vector<8x8x36xf32>
    %33 = vector.shape_cast %32 : vector<8x8x36xf32> to vector<64x36xf32>
    %c0_54 = arith.constant 0 : index
    %c0_55 = arith.constant 0 : index
    %34 = vector.load %arg2[%c0_54, %c0_55] : memref<36x8xf32, #tpu.memory_space<vmem>>, vector<36x8xf32>
    %cst_56 = arith.constant dense<0.000000e+00> : vector<64x8xf32>
    %35 = tpu.matmul %33, %34, %cst_56 {dimension_numbers = #tpu.dot_dimension_numbers<[1], [0], [0], [1], [0, 0, 1, 1], [], []>} : vector<64x36xf32>, vector<36x8xf32>, vector<64x8xf32> -> vector<64x8xf32>
    %c0_57 = arith.constant 0 : index
    %c0_58 = arith.constant 0 : index
    %36 = vector.load %arg3[%c0_57, %c0_58] : memref<1x8xf32, #tpu.memory_space<vmem>>, vector<1x8xf32>
    %37 = vector.broadcast %36 : vector<1x8xf32> to vector<64x8xf32>
    %38 = arith.mulf %35, %37 : vector<64x8xf32>
    %c0_59 = arith.constant 0 : index
    %c0_60 = arith.constant 0 : index
    %39 = vector.load %arg4[%c0_59, %c0_60] : memref<1x8xf32, #tpu.memory_space<vmem>>, vector<1x8xf32>
    %40 = vector.broadcast %39 : vector<1x8xf32> to vector<64x8xf32>
    %41 = arith.addf %38, %40 : vector<64x8xf32>
    %cst_61 = arith.constant 0.000000e+00 : f32
    %42 = vector.broadcast %cst_61 : f32 to vector<64x8xf32>
    %43 = arith.maximumf %41, %42 : vector<64x8xf32>
    %44 = vector.shape_cast %43 : vector<64x8xf32> to vector<8x8x8xf32>
    %c1_62 = arith.constant 1 : index
    %c1_63 = arith.constant 1 : index
    %c0_64 = arith.constant 0 : index
    %45 = vector.load %arg10[%c1_62, %c1_63, %c0_64] : memref<10x10x8xf32, #tpu.memory_space<vmem>>, vector<8x8x8xf32>
    tpu.vector_store %arg10[%c1_62, %c1_63, %c0_64], %44 {strides = array<i32>} : memref<10x10x8xf32, #tpu.memory_space<vmem>>, vector<8x8x8xf32>,
    %cst_65 = arith.constant 0.000000e+00 : f32
    %46 = vector.broadcast %cst_65 : f32 to vector<8x1x8xf32>
    %c1_66 = arith.constant 1 : index
    %c0_67 = arith.constant 0 : index
    %c0_68 = arith.constant 0 : index
    %47 = vector.load %arg10[%c1_66, %c0_67, %c0_68] : memref<10x10x8xf32, #tpu.memory_space<vmem>>, vector<8x1x8xf32>
    tpu.vector_store %arg10[%c1_66, %c0_67, %c0_68], %46 {strides = array<i32>} : memref<10x10x8xf32, #tpu.memory_space<vmem>>, vector<8x1x8xf32>,
    %cst_69 = arith.constant 0.000000e+00 : f32
    %48 = vector.broadcast %cst_69 : f32 to vector<8x1x8xf32>
    %c1_70 = arith.constant 1 : index
    %c9_71 = arith.constant 9 : index
    %c0_72 = arith.constant 0 : index
    %49 = vector.load %arg10[%c1_70, %c9_71, %c0_72] : memref<10x10x8xf32, #tpu.memory_space<vmem>>, vector<8x1x8xf32>
    tpu.vector_store %arg10[%c1_70, %c9_71, %c0_72], %48 {strides = array<i32>} : memref<10x10x8xf32, #tpu.memory_space<vmem>>, vector<8x1x8xf32>,
    %c0_73 = arith.constant 0 : index
    %c0_74 = arith.constant 0 : index
    %c0_75 = arith.constant 0 : index
    %50 = vector.load %arg10[%c0_73, %c0_74, %c0_75] : memref<10x10x8xf32, #tpu.memory_space<vmem>>, vector<8x8x8xf32>
    %c0_76 = arith.constant 0 : index
    %c1_77 = arith.constant 1 : index
    %c0_78 = arith.constant 0 : index
    %51 = vector.load %arg10[%c0_76, %c1_77, %c0_78] : memref<10x10x8xf32, #tpu.memory_space<vmem>>, vector<8x8x8xf32>
    %c0_79 = arith.constant 0 : index
    %c2_80 = arith.constant 2 : index
    %c0_81 = arith.constant 0 : index
    %52 = vector.load %arg10[%c0_79, %c2_80, %c0_81] : memref<10x10x8xf32, #tpu.memory_space<vmem>>, vector<8x8x8xf32>
    %c1_82 = arith.constant 1 : index
    %c0_83 = arith.constant 0 : index
    %c0_84 = arith.constant 0 : index
    %53 = vector.load %arg10[%c1_82, %c0_83, %c0_84] : memref<10x10x8xf32, #tpu.memory_space<vmem>>, vector<8x8x8xf32>
    %c1_85 = arith.constant 1 : index
    %c1_86 = arith.constant 1 : index
    %c0_87 = arith.constant 0 : index
    %54 = vector.load %arg10[%c1_85, %c1_86, %c0_87] : memref<10x10x8xf32, #tpu.memory_space<vmem>>, vector<8x8x8xf32>
    %c1_88 = arith.constant 1 : index
    %c2_89 = arith.constant 2 : index
    %c0_90 = arith.constant 0 : index
    %55 = vector.load %arg10[%c1_88, %c2_89, %c0_90] : memref<10x10x8xf32, #tpu.memory_space<vmem>>, vector<8x8x8xf32>
    %c2_91 = arith.constant 2 : index
    %c0_92 = arith.constant 0 : index
    %c0_93 = arith.constant 0 : index
    %56 = vector.load %arg10[%c2_91, %c0_92, %c0_93] : memref<10x10x8xf32, #tpu.memory_space<vmem>>, vector<8x8x8xf32>
    %c2_94 = arith.constant 2 : index
    %c1_95 = arith.constant 1 : index
    %c0_96 = arith.constant 0 : index
    %57 = vector.load %arg10[%c2_94, %c1_95, %c0_96] : memref<10x10x8xf32, #tpu.memory_space<vmem>>, vector<8x8x8xf32>
    %c2_97 = arith.constant 2 : index
    %c2_98 = arith.constant 2 : index
    %c0_99 = arith.constant 0 : index
    %58 = vector.load %arg10[%c2_97, %c2_98, %c0_99] : memref<10x10x8xf32, #tpu.memory_space<vmem>>, vector<8x8x8xf32>
    %59 = tpu.concatenate %50, %51, %52, %53, %54, %55, %56, %57, %58 in 2 : vector<8x8x8xf32>, vector<8x8x8xf32>, vector<8x8x8xf32>, vector<8x8x8xf32>, vector<8x8x8xf32>, vector<8x8x8xf32>, vector<8x8x8xf32>, vector<8x8x8xf32>, vector<8x8x8xf32> -> vector<8x8x72xf32>
    %60 = vector.shape_cast %59 : vector<8x8x72xf32> to vector<64x72xf32>
    %c0_100 = arith.constant 0 : index
    %c0_101 = arith.constant 0 : index
    %61 = vector.load %arg5[%c0_100, %c0_101] : memref<72x128xf32, #tpu.memory_space<vmem>>, vector<72x128xf32>
    %cst_102 = arith.constant dense<0.000000e+00> : vector<64x128xf32>
    %62 = tpu.matmul %60, %61, %cst_102 {dimension_numbers = #tpu.dot_dimension_numbers<[1], [0], [0], [1], [0, 0, 1, 1], [], []>} : vector<64x72xf32>, vector<72x128xf32>, vector<64x128xf32> -> vector<64x128xf32>
    %c0_103 = arith.constant 0 : index
    %c0_104 = arith.constant 0 : index
    %63 = vector.load %arg6[%c0_103, %c0_104] : memref<1x128xf32, #tpu.memory_space<vmem>>, vector<1x128xf32>
    %64 = vector.broadcast %63 : vector<1x128xf32> to vector<64x128xf32>
    %65 = arith.mulf %62, %64 : vector<64x128xf32>
    %c0_105 = arith.constant 0 : index
    %c0_106 = arith.constant 0 : index
    %66 = vector.load %arg7[%c0_105, %c0_106] : memref<1x128xf32, #tpu.memory_space<vmem>>, vector<1x128xf32>
    %67 = vector.broadcast %66 : vector<1x128xf32> to vector<64x128xf32>
    %68 = arith.addf %65, %67 : vector<64x128xf32>
    %cst_107 = arith.constant 0.000000e+00 : f32
    %69 = vector.broadcast %cst_107 : f32 to vector<64x128xf32>
    %70 = arith.maximumf %68, %69 : vector<64x128xf32>
    %c0_108 = arith.constant 0 : index
    %c0_109 = arith.constant 0 : index
    %c0_110 = arith.constant 0 : index
    %71 = vector.load %arg8[%c0_108, %c0_109, %c0_110] : memref<1x64x128xf32, #tpu.memory_space<vmem>>, vector<1x64x128xf32>
    %72 = vector.shape_cast %71 : vector<1x64x128xf32> to vector<64x128xf32>
    %73 = vector.shape_cast %70 : vector<64x128xf32> to vector<1x64x128xf32>
    tpu.vector_store %arg8[%c0_108, %c0_109, %c0_110], %73 {strides = array<i32>} : memref<1x64x128xf32, #tpu.memory_space<vmem>>, vector<1x64x128xf32>,
    return
  }
  func.func @transform_0(%arg0: i32) -> (i32, i32, i32, i32, i32) {
    %c0_i32 = arith.constant 0 : i32
    %c0_i32_0 = arith.constant 0 : i32
    %c0_i32_1 = arith.constant 0 : i32
    %c0_i32_2 = arith.constant 0 : i32
    %c0_i32_3 = arith.constant 0 : i32
    return %arg0, %c0_i32, %c0_i32_0, %c0_i32_1, %c0_i32_2 : i32, i32, i32, i32, i32
  }
  func.func @transform_1(%arg0: i32) -> (i32, i32) {
    %c0_i32 = arith.constant 0 : i32
    %c0_i32_0 = arith.constant 0 : i32
    %c0_i32_1 = arith.constant 0 : i32
    return %c0_i32, %c0_i32_0 : i32, i32
  }
  func.func @transform_2(%arg0: i32) -> (i32, i32) {
    %c0_i32 = arith.constant 0 : i32
    %c0_i32_0 = arith.constant 0 : i32
    %c0_i32_1 = arith.constant 0 : i32
    return %c0_i32, %c0_i32_0 : i32, i32
  }
  func.func @transform_3(%arg0: i32) -> (i32, i32) {
    %c0_i32 = arith.constant 0 : i32
    %c0_i32_0 = arith.constant 0 : i32
    %c0_i32_1 = arith.constant 0 : i32
    return %c0_i32, %c0_i32_0 : i32, i32
  }
  func.func @transform_4(%arg0: i32) -> (i32, i32) {
    %c0_i32 = arith.constant 0 : i32
    %c0_i32_0 = arith.constant 0 : i32
    %c0_i32_1 = arith.constant 0 : i32
    return %c0_i32, %c0_i32_0 : i32, i32
  }
  func.func @transform_5(%arg0: i32) -> (i32, i32) {
    %c0_i32 = arith.constant 0 : i32
    %c0_i32_0 = arith.constant 0 : i32
    %c0_i32_1 = arith.constant 0 : i32
    return %c0_i32, %c0_i32_0 : i32, i32
  }
  func.func @transform_6(%arg0: i32) -> (i32, i32) {
    %c0_i32 = arith.constant 0 : i32
    %c0_i32_0 = arith.constant 0 : i32
    %c0_i32_1 = arith.constant 0 : i32
    return %c0_i32, %c0_i32_0 : i32, i32
  }
  func.func @transform_7(%arg0: i32) -> (i32, i32, i32) {
    %c0_i32 = arith.constant 0 : i32
    %c0_i32_0 = arith.constant 0 : i32
    %c0_i32_1 = arith.constant 0 : i32
    return %arg0, %c0_i32, %c0_i32_0 : i32, i32, i32
  }
}

</mosaic_0001>

<llo_original>
// kernel: tpu_custom_call.1
$region0: #{tpu_custom_call.1}
  #allocation0 [shape = 'u32[]', space=smem, size = 0x4, offset = 0x4, fixed_abs, tag = 'smem constant byte address 0x4 - core index']
  #allocation1 [shape = 'u32[144,128]{1,0:T(1,128)}', space=vmem, size = 0x12000, scoped, tag = 'internal scratch']
  #allocation2 [shape = 'f32[10,10,4]{2,1,0:T(8,128)}', space=vmem, size = 0x14000, scoped, tag = 'scratch operand']
  #allocation3 [shape = 'f32[10,10,8]{2,1,0:T(8,128)}', space=vmem, size = 0x14000, scoped, tag = 'scratch operand']
  %s0 = inlined_call_operand.hbm [shape: f32[2,8,2,8,8], index: 0, kind: input, shape index: {}]
  %s1 = inlined_call_operand.vmem [shape: f32[36,8], index: 1, kind: input, shape index: {}]
  %s2 = inlined_call_operand.vmem [shape: f32[1,8], index: 2, kind: input, shape index: {}]
  %s3 = inlined_call_operand.vmem [shape: f32[1,8], index: 3, kind: input, shape index: {}]
  %s4 = inlined_call_operand.hbm [shape: f32[72,128], index: 4, kind: input, shape index: {}]
  %s5 = inlined_call_operand.vmem [shape: f32[1,128], index: 5, kind: input, shape index: {}]
  %s6 = inlined_call_operand.vmem [shape: f32[1,128], index: 6, kind: input, shape index: {}]
  %s7 = inlined_call_operand.hbm [shape: f32[2,64,128], index: 7, kind: output, shape index: {}]
  %s8 = sld [smem:[#allocation0]]
  $region69: #{tpu_custom_call.1} parent=0
    _
  %s10 = ssub.s32 1, %s8
  %s11 = scalar_select 0, %s10, %s8
  $region1: #{tpu_custom_call.1} parent=0
    #allocation4 [shape = 'u8[131072]{0}', space=vmem, size = 0x20000, scoped, tag = 'input window, operand 0']
    #allocation5 [shape = 's32[2]{0}', space=sflag, size = 0x8, scoped, tag = 'scoped memory for tpu_custom_call.1']
    #allocation6 [shape = 's32[2]{0}', space=sflag, size = 0x8, scoped, tag = 'scoped memory for tpu_custom_call.1']
    #allocation7 [shape = 'u8[36864]{0}', space=vmem, size = 0x9000, scoped, tag = 'input window, operand 4, single buffered']
    #allocation8 [shape = 's32[1]{0}', space=sflag, size = 0x4, scoped, tag = 'scoped memory for tpu_custom_call.1']
    #allocation9 [shape = 'u8[65536]{0}', space=vmem, size = 0x10000, scoped, tag = 'output window, operand 0']
    %12 = vsyncpa [#allocation5], 0
    %s13 = scalar_lea.sflag [#allocation5], 1
    %14 = vsyncpa %s13, 0
    %15 = vsyncpa [#allocation8], 0
    %16 = vsyncpa [#allocation6], 0
    %s17 = scalar_lea.sflag [#allocation6], 1
    %18 = vsyncpa %s17, 0
    loop: start=0, step=1, limit=4
    $region2: #{tpu_custom_call.1} parent=1 // loop_pre_header
      _
    $region3: #{tpu_custom_call.1} parent=1 // loop_header
      %s20 = sphi 0, %s24
      %p21 = scmp.ge.s32.totalorder %s20, 4
      %s30 = sphi 0, %s32
      %s33 = sphi 0, %s30
      %s34 = sphi 0, %s33
      %s50 = sphi 0, %s34
      %s54 = sphi 0, %s54
      %s56 = sphi 0, %s54
      %s57 = sphi 0, %s56
      %s71 = sphi 0, %s57
      %s75 = sphi 0, %s75
      %s77 = sphi 0, %s75
      %s78 = sphi 0, %s77
      %s92 = sphi 0, %s78
      %s96 = sphi 0, %s96
      %s98 = sphi 0, %s96
      %s99 = sphi 0, %s98
      %s113 = sphi 0, %s99
      %s117 = sphi 0, %s117
      %s119 = sphi 0, %s117
      %s120 = sphi 0, %s119
      %s134 = sphi 0, %s120
      %s138 = sphi 0, %s138
      %s140 = sphi 0, %s138
      %s141 = sphi 0, %s140
      %s155 = sphi 0, %s141
      %s159 = sphi 0, %s159
      %s161 = sphi 0, %s159
      %s162 = sphi 0, %s161
      %s176 = sphi 0, %s162
      %s182 = sphi 0, %s184
      %s185 = sphi 0, %s182
      %s186 = sphi 0, %s185
      %s202 = sphi 0, %s186
    $region4: #{tpu_custom_call.1} parent=1 // loop_header_branch
      %23 = sbr.rel (%p21) target = $region8
    $region5: #{tpu_custom_call.1} parent=1 // loop_body
      %s25 = ssub.s32 %s20, 1
      %s26 = ssub.s32 %s20, 2
      %s27 = sadd.s32 %s20, 1
      %s28 = ssub.s32 %s20, %s27
      %p29 = scmp.eq.s32.totalorder %s28, 0
      %s31 = sadd.s32 %s30, 1
      %s32 = scalar_select %p29, %s30, %s31
      %p35 = pneg %p29
      %p36 = scmp.eq.s32.totalorder %s20, 1
      %p37 = por %p35, %p36
      %p38 = scmp.ne.s32.totalorder %s30, %s33
      %p39 = scmp.eq.s32.totalorder %s20, 0
      %p40 = por %p38, %p39
      %p41 = scmp.ne.s32.totalorder %s30, %s33
      %p42 = scmp.eq.s32.totalorder %s25, 1
      %p43 = por %p41, %p42
      %p44 = scmp.ne.s32.totalorder %s33, %s34
      %p45 = scmp.eq.s32.totalorder %s25, 0
      %p46 = por %p44, %p45
      %p47 = scmp.ne.s32.totalorder %s33, %s34
      %p48 = scmp.eq.s32.totalorder %s26, 1
      %p49 = por %p47, %p48
      %p51 = scmp.ne.s32.totalorder %s34, %s50
      %p52 = scmp.eq.s32.totalorder %s26, 0
      %p53 = por %p51, %p52
      %s55 = sadd.s32 %s54, 1
      %p58 = scmp.eq.s32.totalorder %s20, 1
      %p59 = scmp.ne.s32.totalorder %s54, %s56
      %p60 = scmp.eq.s32.totalorder %s20, 0
      %p61 = por %p59, %p60
      %p62 = scmp.ne.s32.totalorder %s54, %s56
      %p63 = scmp.eq.s32.totalorder %s25, 1
      %p64 = por %p62, %p63
      %p65 = scmp.ne.s32.totalorder %s56, %s57
      %p66 = scmp.eq.s32.totalorder %s25, 0
      %p67 = por %p65, %p66
      %p68 = scmp.ne.s32.totalorder %s56, %s57
      %p69 = scmp.eq.s32.totalorder %s26, 1
      %p70 = por %p68, %p69
      %p72 = scmp.ne.s32.totalorder %s57, %s71
      %p73 = scmp.eq.s32.totalorder %s26, 0
      %p74 = por %p72, %p73
      %s76 = sadd.s32 %s75, 1
      %p79 = scmp.eq.s32.totalorder %s20, 1
      %p80 = scmp.ne.s32.totalorder %s75, %s77
      %p81 = scmp.eq.s32.totalorder %s20, 0
      %p82 = por %p80, %p81
      %p83 = scmp.ne.s32.totalorder %s75, %s77
      %p84 = scmp.eq.s32.totalorder %s25, 1
      %p85 = por %p83, %p84
      %p86 = scmp.ne.s32.totalorder %s77, %s78
      %p87 = scmp.eq.s32.totalorder %s25, 0
      %p88 = por %p86, %p87
      %p89 = scmp.ne.s32.totalorder %s77, %s78
      %p90 = scmp.eq.s32.totalorder %s26, 1
      %p91 = por %p89, %p90
      %p93 = scmp.ne.s32.totalorder %s78, %s92
      %p94 = scmp.eq.s32.totalorder %s26, 0
      %p95 = por %p93, %p94
      %s97 = sadd.s32 %s96, 1
      %p100 = scmp.eq.s32.totalorder %s20, 1
      %p101 = scmp.ne.s32.totalorder %s96, %s98
      %p102 = scmp.eq.s32.totalorder %s20, 0
      %p103 = por %p101, %p102
      %p104 = scmp.ne.s32.totalorder %s96, %s98
      %p105 = scmp.eq.s32.totalorder %s25, 1
      %p106 = por %p104, %p105
      %p107 = scmp.ne.s32.totalorder %s98, %s99
      %p108 = scmp.eq.s32.totalorder %s25, 0
      %p109 = por %p107, %p108
      %p110 = scmp.ne.s32.totalorder %s98, %s99
      %p111 = scmp.eq.s32.totalorder %s26, 1
      %p112 = por %p110, %p111
      %p114 = scmp.ne.s32.totalorder %s99, %s113
      %p115 = scmp.eq.s32.totalorder %s26, 0
      %p116 = por %p114, %p115
      %s118 = sadd.s32 %s117, 1
      %p121 = scmp.eq.s32.totalorder %s20, 1
      %p122 = scmp.ne.s32.totalorder %s117, %s119
      %p123 = scmp.eq.s32.totalorder %s20, 0
      %p124 = por %p122, %p123
      %p125 = scmp.ne.s32.totalorder %s117, %s119
      %p126 = scmp.eq.s32.totalorder %s25, 1
      %p127 = por %p125, %p126
      %p128 = scmp.ne.s32.totalorder %s119, %s120
      %p129 = scmp.eq.s32.totalorder %s25, 0
      %p130 = por %p128, %p129
      %p131 = scmp.ne.s32.totalorder %s119, %s120
      %p132 = scmp.eq.s32.totalorder %s26, 1
      %p133 = por %p131, %p132
      %p135 = scmp.ne.s32.totalorder %s120, %s134
      %p136 = scmp.eq.s32.totalorder %s26, 0
      %p137 = por %p135, %p136
      %s139 = sadd.s32 %s138, 1
      %p142 = scmp.eq.s32.totalorder %s20, 1
      %p143 = scmp.ne.s32.totalorder %s138, %s140
      %p144 = scmp.eq.s32.totalorder %s20, 0
      %p145 = por %p143, %p144
      %p146 = scmp.ne.s32.totalorder %s138, %s140
      %p147 = scmp.eq.s32.totalorder %s25, 1
      %p148 = por %p146, %p147
      %p149 = scmp.ne.s32.totalorder %s140, %s141
      %p150 = scmp.eq.s32.totalorder %s25, 0
      %p151 = por %p149, %p150
      %p152 = scmp.ne.s32.totalorder %s140, %s141
      %p153 = scmp.eq.s32.totalorder %s26, 1
      %p154 = por %p152, %p153
      %p156 = scmp.ne.s32.totalorder %s141, %s155
      %p157 = scmp.eq.s32.totalorder %s26, 0
      %p158 = por %p156, %p157
      %s160 = sadd.s32 %s159, 1
      %p163 = scmp.eq.s32.totalorder %s20, 1
      %p164 = scmp.ne.s32.totalorder %s159, %s161
      %p165 = scmp.eq.s32.totalorder %s20, 0
      %p166 = por %p164, %p165
      %p167 = scmp.ne.s32.totalorder %s159, %s161
      %p168 = scmp.eq.s32.totalorder %s25, 1
      %p169 = por %p167, %p168
      %p170 = scmp.ne.s32.totalorder %s161, %s162
      %p171 = scmp.eq.s32.totalorder %s25, 0
      %p172 = por %p170, %p171
      %p173 = scmp.ne.s32.totalorder %s161, %s162
      %p174 = scmp.eq.s32.totalorder %s26, 1
      %p175 = por %p173, %p174
      %p177 = scmp.ne.s32.totalorder %s162, %s176
      %p178 = scmp.eq.s32.totalorder %s26, 0
      %p179 = por %p177, %p178
      %s180 = ssub.s32 %s20, %s27
      %p181 = scmp.eq.s32.totalorder %s180, 0
      %s183 = sadd.s32 %s182, 1
      %s184 = scalar_select %p181, %s182, %s183
      %p187 = pneg %p181
      %p188 = scmp.eq.s32.totalorder %s20, 1
      %p189 = por %p187, %p188
      %p190 = scmp.ne.s32.totalorder %s182, %s185
      %p191 = scmp.eq.s32.totalorder %s20, 0
      %p192 = por %p190, %p191
      %p193 = scmp.ne.s32.totalorder %s182, %s185
      %p194 = scmp.eq.s32.totalorder %s25, 1
      %p195 = por %p193, %p194
      %p196 = scmp.ne.s32.totalorder %s185, %s186
      %p197 = scmp.eq.s32.totalorder %s25, 0
      %p198 = por %p196, %p197
      %p199 = scmp.ne.s32.totalorder %s185, %s186
      %p200 = scmp.eq.s32.totalorder %s26, 1
      %p201 = por %p199, %p200
      %p203 = scmp.ne.s32.totalorder %s186, %s202
      %p204 = scmp.eq.s32.totalorder %s26, 0
      %p205 = por %p203, %p204
      %p206 = scmp.le.s32.totalorder 1, %s20
      %p207 = scmp.lt.s32.totalorder %s20, 3
      %p208 = pnand %p206, %p207
      %p209 = pneg %p208
      // Predicated region
      $region9: #{tpu_custom_call.1} parent=5 // pred_check
        _
      $region10: #{tpu_custom_call.1} parent=5 // pred_check_branch
        %211 = sbr.rel (%p208) target = $region12
      $region11: #{tpu_custom_call.1} parent=5 // pred_region
        %s212 = ssub.s32 %s20, 1
        // Predicated region
        $region13: #{tpu_custom_call.1} parent=11 // pred_check
          %p213 = pneg %p67
        $region14: #{tpu_custom_call.1} parent=11 // pred_check_branch
          %215 = sbr.rel (%p213) target = $region16
        $region15: #{tpu_custom_call.1} parent=11 // pred_region
          _
        $region16: #{tpu_custom_call.1} parent=11 // pred_fallthru
          _
        // Predicated region
        $region17: #{tpu_custom_call.1} parent=11 // pred_check
          %p216 = pneg %p88
        $region18: #{tpu_custom_call.1} parent=11 // pred_check_branch
          %218 = sbr.rel (%p216) target = $region20
        $region19: #{tpu_custom_call.1} parent=11 // pred_region
          _
        $region20: #{tpu_custom_call.1} parent=11 // pred_fallthru
          _
        // Predicated region
        $region21: #{tpu_custom_call.1} parent=11 // pred_check
          %p219 = pneg %p109
        $region22: #{tpu_custom_call.1} parent=11 // pred_check_branch
          %221 = sbr.rel (%p219) target = $region24
        $region23: #{tpu_custom_call.1} parent=11 // pred_region
          _
        $region24: #{tpu_custom_call.1} parent=11 // pred_fallthru
          _
        // Predicated region
        $region25: #{tpu_custom_call.1} parent=11 // pred_check
          %p222 = pneg %p130
        $region26: #{tpu_custom_call.1} parent=11 // pred_check_branch
          %224 = sbr.rel (%p222) target = $region28
        $region27: #{tpu_custom_call.1} parent=11 // pred_region
          %s226 = ssub.s32 1152, 1152
          %227 = vsyncadd [#allocation8], %s226
          %s228 = sshll.u32 [#allocation7], 4
          %s229 = int_to_ptr.vmem [resolvable:$true] %s228
          %234 = dma.hbm_to_vmem [thread:$0]  %s4, 1152, %s229, [#allocation8], 128, 128, 8
        $region28: #{tpu_custom_call.1} parent=11 // pred_fallthru
          _
        // Predicated region
        $region29: #{tpu_custom_call.1} parent=11 // pred_check
          %p235 = pneg %p151
        $region30: #{tpu_custom_call.1} parent=11 // pred_check_branch
          %237 = sbr.rel (%p235) target = $region32
        $region31: #{tpu_custom_call.1} parent=11 // pred_region
          _
        $region32: #{tpu_custom_call.1} parent=11 // pred_fallthru
          _
        // Predicated region
        $region33: #{tpu_custom_call.1} parent=11 // pred_check
          %p238 = pneg %p172
        $region34: #{tpu_custom_call.1} parent=11 // pred_check_branch
          %240 = sbr.rel (%p238) target = $region36
        $region35: #{tpu_custom_call.1} parent=11 // pred_region
          _
        $region36: #{tpu_custom_call.1} parent=11 // pred_fallthru
          _
      $region12: #{tpu_custom_call.1} parent=5 // pred_fallthru
        _
      %p241 = scmp.lt.s32.totalorder %s20, 2
      // Predicated region
      $region37: #{tpu_custom_call.1} parent=5 // pred_check
        %p242 = pneg %p241
      $region38: #{tpu_custom_call.1} parent=5 // pred_check_branch
        %244 = sbr.rel (%p242) target = $region40
      $region39: #{tpu_custom_call.1} parent=5 // pred_region
        // Predicated region
        $region41: #{tpu_custom_call.1} parent=39 // pred_check
          %p245 = pneg %p40
        $region42: #{tpu_custom_call.1} parent=39 // pred_check_branch
          %247 = sbr.rel (%p245) target = $region44
        $region43: #{tpu_custom_call.1} parent=39 // pred_region
          %s248 = sand.u32 %s30, 1
          %s249 = scalar_lea.sflag [#allocation5], %s248
          %s250 = sand.u32 %s30, 1
          %s251 = smul.addr %s250, 128
          %s252 = scalar_lea.vmem [#allocation4], %s251
          %s254 = ssub.s32 2048, 2048
          %255 = vsyncadd %s249, %s254
          %s256 = smul.addr %s20, 16
          %s257 = smul.addr %s256, 128
          %s258 = scalar_lea.hbm %s0, %s257
          %s259 = sshll.u32 %s252, 4
          %s260 = int_to_ptr.vmem [resolvable:$true] %s259
          %265 = dma.hbm_to_vmem [thread:$0]  %s258, 2048, %s260, %s249, 128, 128, 8
        $region44: #{tpu_custom_call.1} parent=39 // pred_fallthru
          _
      $region40: #{tpu_custom_call.1} parent=5 // pred_fallthru
        _
      %p266 = scmp.le.s32.totalorder 1, %s20
      %p267 = scmp.lt.s32.totalorder %s20, 3
      %p268 = pnand %p266, %p267
      %p269 = pneg %p268
      // Predicated region
      $region45: #{tpu_custom_call.1} parent=5 // pred_check
        _
      $region46: #{tpu_custom_call.1} parent=5 // pred_check_branch
        %271 = sbr.rel (%p268) target = $region48
      $region47: #{tpu_custom_call.1} parent=5 // pred_region
        %s272 = ssub.s32 %s20, 1
        %s273 = sand.u32 %s33, 1
        %s274 = scalar_lea.sflag [#allocation5], %s273
        %s275 = sand.u32 %s33, 1
        %s276 = smul.addr %s275, 128
        %s277 = scalar_lea.vmem [#allocation4], %s276
        // Predicated region
        $region49: #{tpu_custom_call.1} parent=47 // pred_check
          %p278 = pneg %p46
        $region50: #{tpu_custom_call.1} parent=47 // pred_check_branch
          %280 = sbr.rel (%p278) target = $region52
        $region51: #{tpu_custom_call.1} parent=47 // pred_region
          %281 = dma.done %s274, 2048
        $region52: #{tpu_custom_call.1} parent=47 // pred_fallthru
          _
        // Predicated region
        $region53: #{tpu_custom_call.1} parent=47 // pred_check
          %p282 = pneg %p130
        $region54: #{tpu_custom_call.1} parent=47 // pred_check_branch
          %284 = sbr.rel (%p282) target = $region56
        $region55: #{tpu_custom_call.1} parent=47 // pred_region
          %285 = dma.done [#allocation8], 1152
        $region56: #{tpu_custom_call.1} parent=47 // pred_fallthru
          _
        %s286 = sand.u32 %s33, 1
        %s287 = scalar_lea.sflag [#allocation5], %s286
        %s288 = sand.u32 %s33, 1
        %s289 = smul.addr %s288, 128
        %s290 = scalar_lea.vmem [#allocation4], %s289
        %p291 = pneg %p46
        %p292 = pneg %p43
        %p293 = pneg %p67
        %p294 = pneg %p64
        %p295 = pneg %p88
        %p296 = pneg %p85
        %p297 = pneg %p109
        %p298 = pneg %p106
        %p299 = pneg %p130
        %p300 = pneg %p127
        %p301 = pneg %p151
        %p302 = pneg %p148
        %p303 = pneg %p172
        %p304 = pneg %p169
        %p305 = pneg %p198
        %p306 = pneg %p195
        %s307 = sand.u32 %s185, 1
        %s308 = scalar_lea.sflag [#allocation6], %s307
        %s309 = sand.u32 %s185, 1
        %s310 = smul.addr %s309, 64
        %s311 = scalar_lea.vmem [#allocation9], %s310
        %vm312 = vcmask 31744
        %313 = vst.msk [vmem:[#allocation2] sm:$0xff] %vm312, 0.0
        %vm314 = vcmask 25600
        %315 = vst.msk [vmem:[#allocation2 + $0x8] sm:$0x3] %vm314, 0.0
        %s316 = scalar_lea.vmem [#allocation2], 144
        %317 = vst.msk [vmem:[%s316] sm:$0xff] %vm312, 0.0
        %318 = vst.msk [vmem:[%s316 + $0x8] sm:$0x3] %vm314, 0.0
        %vm319 = vcmask 64512
        %320 = vst.msk [vmem:[#allocation3] sm:$0xff] %vm319, 0.0
        %vm321 = vcmask 58368
        %322 = vst.msk [vmem:[#allocation3 + $0x8] sm:$0x3] %vm321, 0.0
        %s323 = scalar_lea.vmem [#allocation3], 144
        %324 = vst.msk [vmem:[%s323] sm:$0xff] %vm319, 0.0
        %325 = vst.msk [vmem:[%s323 + $0x8] sm:$0x3] %vm321, 0.0
        %v326 = vld [vmem:[%s277] sm:$0xff]
        %v327 = vld [vmem:[%s277 + $0x8] sm:$0xff]
        %v328 = vld [vmem:[%s277 + $0x10] sm:$0xff]
        %v329 = vld [vmem:[%s277 + $0x18] sm:$0xff]
        %v330 = vld [vmem:[%s277 + $0x20] sm:$0xff]
        %v331 = vld [vmem:[%s277 + $0x28] sm:$0xff]
        %v332 = vld [vmem:[%s277 + $0x30] sm:$0xff]
        %v333 = vld [vmem:[%s277 + $0x38] sm:$0xff]
        %v334 = vld [vmem:[%s277 + $0x40] sm:$0xff]
        %v335 = vld [vmem:[%s277 + $0x48] sm:$0xff]
        %v336 = vld [vmem:[%s277 + $0x50] sm:$0xff]
        %v337 = vld [vmem:[%s277 + $0x58] sm:$0xff]
        %v338 = vld [vmem:[%s277 + $0x60] sm:$0xff]
        %v339 = vld [vmem:[%s277 + $0x68] sm:$0xff]
        %v340 = vld [vmem:[%s277 + $0x70] sm:$0xff]
        %v341 = vld [vmem:[%s277 + $0x78] sm:$0xff]
        %v342 = vmax.f32 %v326, %v327
        %v343 = vmax.f32 %v328, %v329
        %v344 = vmax.f32 %v330, %v331
        %v345 = vmax.f32 %v332, %v333
        %v346 = vmax.f32 %v334, %v335
        %v347 = vmax.f32 %v336, %v337
        %v348 = vmax.f32 %v338, %v339
        %v349 = vmax.f32 %v340, %v341
        %358 = vrot.lane.b32.xlu0 %v342, 124
        %v359 = vpop.permute.xlu0 %358
        %360 = vrot.lane.b32.xlu0 %v343, 124
        %v361 = vpop.permute.xlu0 %360
        %362 = vrot.lane.b32.xlu0 %v344, 124
        %v363 = vpop.permute.xlu0 %362
        %364 = vrot.lane.b32.xlu0 %v345, 124
        %v365 = vpop.permute.xlu0 %364
        %366 = vrot.lane.b32.xlu0 %v346, 124
        %v367 = vpop.permute.xlu0 %366
        %368 = vrot.lane.b32.xlu0 %v347, 124
        %v369 = vpop.permute.xlu0 %368
        %370 = vrot.lane.b32.xlu0 %v348, 124
        %v371 = vpop.permute.xlu0 %370
        %372 = vrot.lane.b32.xlu0 %v349, 124
        %v373 = vpop.permute.xlu0 %372
        %v382 = vmax.f32 %v342, %v359
        %v383 = vmax.f32 %v343, %v361
        %v384 = vmax.f32 %v344, %v363
        %v385 = vmax.f32 %v345, %v365
        %v386 = vmax.f32 %v346, %v367
        %v387 = vmax.f32 %v347, %v369
        %v388 = vmax.f32 %v348, %v371
        %v389 = vmax.f32 %v349, %v373
        %s390 = scalar_lea.vmem [#allocation2], 16
        %391 = vst.msk [vmem:[%s390 + $0x1] sm:$0xff] %vm312, %v382
        %392 = vst.msk [vmem:[%s390 + $0x11] sm:$0xff] %vm312, %v383
        %393 = vst.msk [vmem:[%s390 + $0x21] sm:$0xff] %vm312, %v384
        %394 = vst.msk [vmem:[%s390 + $0x31] sm:$0xff] %vm312, %v385
        %395 = vst.msk [vmem:[%s390 + $0x41] sm:$0xff] %vm312, %v386
        %396 = vst.msk [vmem:[%s390 + $0x51] sm:$0xff] %vm312, %v387
        %397 = vst.msk [vmem:[%s390 + $0x61] sm:$0xff] %vm312, %v388
        %398 = vst.msk [vmem:[%s390 + $0x71] sm:$0xff] %vm312, %v389
        %vm399 = vcmask 24576
        %400 = vst.msk [vmem:[%s390] sm:$0x1] %vm399, 0.0
        %401 = vst.msk [vmem:[%s390 + $0x10] sm:$0x1] %vm399, 0.0
        %402 = vst.msk [vmem:[%s390 + $0x20] sm:$0x1] %vm399, 0.0
        %403 = vst.msk [vmem:[%s390 + $0x30] sm:$0x1] %vm399, 0.0
        %404 = vst.msk [vmem:[%s390 + $0x40] sm:$0x1] %vm399, 0.0
        %405 = vst.msk [vmem:[%s390 + $0x50] sm:$0x1] %vm399, 0.0
        %406 = vst.msk [vmem:[%s390 + $0x60] sm:$0x1] %vm399, 0.0
        %407 = vst.msk [vmem:[%s390 + $0x70] sm:$0x1] %vm399, 0.0
        %408 = vst.msk [vmem:[%s390 + $0x9] sm:$0x1] %vm399, 0.0
        %409 = vst.msk [vmem:[%s390 + $0x19] sm:$0x1] %vm399, 0.0
        %410 = vst.msk [vmem:[%s390 + $0x29] sm:$0x1] %vm399, 0.0
        %411 = vst.msk [vmem:[%s390 + $0x39] sm:$0x1] %vm399, 0.0
        %412 = vst.msk [vmem:[%s390 + $0x49] sm:$0x1] %vm399, 0.0
        %413 = vst.msk [vmem:[%s390 + $0x59] sm:$0x1] %vm399, 0.0
        %414 = vst.msk [vmem:[%s390 + $0x69] sm:$0x1] %vm399, 0.0
        %415 = vst.msk [vmem:[%s390 + $0x79] sm:$0x1] %vm399, 0.0
        %v416 = vld [vmem:[#allocation2] sm:$0xff]
        %v417 = vld [vmem:[#allocation2 + $0x10] sm:$0xff]
        %v418 = vld [vmem:[#allocation2 + $0x20] sm:$0xff]
        %v419 = vld [vmem:[#allocation2 + $0x30] sm:$0xff]
        %v420 = vld [vmem:[#allocation2 + $0x40] sm:$0xff]
        %v421 = vld [vmem:[#allocation2 + $0x50] sm:$0xff]
        %v422 = vld [vmem:[#allocation2 + $0x60] sm:$0xff]
        %v423 = vld [vmem:[#allocation2 + $0x70] sm:$0xff]
        %v424 = vld [vmem:[#allocation2 + $0x1] sm:$0xff]
        %v425 = vld [vmem:[#allocation2 + $0x11] sm:$0xff]
        %v426 = vld [vmem:[#allocation2 + $0x21] sm:$0xff]
        %v427 = vld [vmem:[#allocation2 + $0x31] sm:$0xff]
        %v428 = vld [vmem:[#allocation2 + $0x41] sm:$0xff]
        %v429 = vld [vmem:[#allocation2 + $0x51] sm:$0xff]
        %v430 = vld [vmem:[#allocation2 + $0x61] sm:$0xff]
        %v431 = vld [vmem:[#allocation2 + $0x71] sm:$0xff]
        %v432 = vld [vmem:[#allocation2 + $0x2] sm:$0xff]
        %v433 = vld [vmem:[#allocation2 + $0x12] sm:$0xff]
        %v434 = vld [vmem:[#allocation2 + $0x22] sm:$0xff]
        %v435 = vld [vmem:[#allocation2 + $0x32] sm:$0xff]
        %v436 = vld [vmem:[#allocation2 + $0x42] sm:$0xff]
        %v437 = vld [vmem:[#allocation2 + $0x52] sm:$0xff]
        %v438 = vld [vmem:[#allocation2 + $0x62] sm:$0xff]
        %v439 = vld [vmem:[#allocation2 + $0x72] sm:$0xff]
        %v440 = vld [vmem:[%s390] sm:$0xff]
        %v441 = vld [vmem:[%s390 + $0x10] sm:$0xff]
        %v442 = vld [vmem:[%s390 + $0x20] sm:$0xff]
        %v443 = vld [vmem:[%s390 + $0x30] sm:$0xff]
        %v444 = vld [vmem:[%s390 + $0x40] sm:$0xff]
        %v445 = vld [vmem:[%s390 + $0x50] sm:$0xff]
        %v446 = vld [vmem:[%s390 + $0x60] sm:$0xff]
        %v447 = vld [vmem:[%s390 + $0x70] sm:$0xff]
        %v448 = vld [vmem:[%s390 + $0x1] sm:$0xff]
        %v449 = vld [vmem:[%s390 + $0x11] sm:$0xff]
        %v450 = vld [vmem:[%s390 + $0x21] sm:$0xff]
        %v451 = vld [vmem:[%s390 + $0x31] sm:$0xff]
        %v452 = vld [vmem:[%s390 + $0x41] sm:$0xff]
        %v453 = vld [vmem:[%s390 + $0x51] sm:$0xff]
        %v454 = vld [vmem:[%s390 + $0x61] sm:$0xff]
        %v455 = vld [vmem:[%s390 + $0x71] sm:$0xff]
        %v456 = vld [vmem:[%s390 + $0x2] sm:$0xff]
        %v457 = vld [vmem:[%s390 + $0x12] sm:$0xff]
        %v458 = vld [vmem:[%s390 + $0x22] sm:$0xff]
        %v459 = vld [vmem:[%s390 + $0x32] sm:$0xff]
        %v460 = vld [vmem:[%s390 + $0x42] sm:$0xff]
        %v461 = vld [vmem:[%s390 + $0x52] sm:$0xff]
        %v462 = vld [vmem:[%s390 + $0x62] sm:$0xff]
        %v463 = vld [vmem:[%s390 + $0x72] sm:$0xff]
        %s464 = scalar_lea.vmem [#allocation2], 32
        %v465 = vld [vmem:[%s464] sm:$0xff]
        %v466 = vld [vmem:[%s464 + $0x10] sm:$0xff]
        %v467 = vld [vmem:[%s464 + $0x20] sm:$0xff]
        %v468 = vld [vmem:[%s464 + $0x30] sm:$0xff]
        %v469 = vld [vmem:[%s464 + $0x40] sm:$0xff]
        %v470 = vld [vmem:[%s464 + $0x50] sm:$0xff]
        %v471 = vld [vmem:[%s464 + $0x60] sm:$0xff]
        %v472 = vld [vmem:[%s464 + $0x70] sm:$0xff]
        %v473 = vld [vmem:[%s464 + $0x1] sm:$0xff]
        %v474 = vld [vmem:[%s464 + $0x11] sm:$0xff]
        %v475 = vld [vmem:[%s464 + $0x21] sm:$0xff]
        %v476 = vld [vmem:[%s464 + $0x31] sm:$0xff]
        %v477 = vld [vmem:[%s464 + $0x41] sm:$0xff]
        %v478 = vld [vmem:[%s464 + $0x51] sm:$0xff]
        %v479 = vld [vmem:[%s464 + $0x61] sm:$0xff]
        %v480 = vld [vmem:[%s464 + $0x71] sm:$0xff]
        %v481 = vld [vmem:[%s464 + $0x2] sm:$0xff]
        %v482 = vld [vmem:[%s464 + $0x12] sm:$0xff]
        %v483 = vld [vmem:[%s464 + $0x22] sm:$0xff]
        %v484 = vld [vmem:[%s464 + $0x32] sm:$0xff]
        %v485 = vld [vmem:[%s464 + $0x42] sm:$0xff]
        %v486 = vld [vmem:[%s464 + $0x52] sm:$0xff]
        %v487 = vld [vmem:[%s464 + $0x62] sm:$0xff]
        %v488 = vld [vmem:[%s464 + $0x72] sm:$0xff]
        %497 = vrot.lane.b32.xlu0 %v424, 4
        %v498 = vpop.permute.xlu0 %497
        %499 = vrot.lane.b32.xlu0 %v425, 4
        %v500 = vpop.permute.xlu0 %499
        %501 = vrot.lane.b32.xlu0 %v426, 4
        %v502 = vpop.permute.xlu0 %501
        %503 = vrot.lane.b32.xlu0 %v427, 4
        %v504 = vpop.permute.xlu0 %503
        %505 = vrot.lane.b32.xlu0 %v428, 4
        %v506 = vpop.permute.xlu0 %505
        %507 = vrot.lane.b32.xlu0 %v429, 4
        %v508 = vpop.permute.xlu0 %507
        %509 = vrot.lane.b32.xlu0 %v430, 4
        %v510 = vpop.permute.xlu0 %509
        %511 = vrot.lane.b32.xlu0 %v431, 4
        %v512 = vpop.permute.xlu0 %511
        %529 = vrot.lane.b32.xlu0 %v432, 8
        %v530 = vpop.permute.xlu0 %529
        %531 = vrot.lane.b32.xlu0 %v433, 8
        %v532 = vpop.permute.xlu0 %531
        %533 = vrot.lane.b32.xlu0 %v434, 8
        %v534 = vpop.permute.xlu0 %533
        %535 = vrot.lane.b32.xlu0 %v435, 8
        %v536 = vpop.permute.xlu0 %535
        %537 = vrot.lane.b32.xlu0 %v436, 8
        %v538 = vpop.permute.xlu0 %537
        %539 = vrot.lane.b32.xlu0 %v437, 8
        %v540 = vpop.permute.xlu0 %539
        %541 = vrot.lane.b32.xlu0 %v438, 8
        %v542 = vpop.permute.xlu0 %541
        %543 = vrot.lane.b32.xlu0 %v439, 8
        %v544 = vpop.permute.xlu0 %543
        %561 = vrot.lane.b32.xlu0 %v440, 12
        %v562 = vpop.permute.xlu0 %561
        %563 = vrot.lane.b32.xlu0 %v441, 12
        %v564 = vpop.permute.xlu0 %563
        %565 = vrot.lane.b32.xlu0 %v442, 12
        %v566 = vpop.permute.xlu0 %565
        %567 = vrot.lane.b32.xlu0 %v443, 12
        %v568 = vpop.permute.xlu0 %567
        %569 = vrot.lane.b32.xlu0 %v444, 12
        %v570 = vpop.permute.xlu0 %569
        %571 = vrot.lane.b32.xlu0 %v445, 12
        %v572 = vpop.permute.xlu0 %571
        %573 = vrot.lane.b32.xlu0 %v446, 12
        %v574 = vpop.permute.xlu0 %573
        %575 = vrot.lane.b32.xlu0 %v447, 12
        %v576 = vpop.permute.xlu0 %575
        %593 = vrot.lane.b32.xlu0 %v448, 16
        %v594 = vpop.permute.xlu0 %593
        %595 = vrot.lane.b32.xlu0 %v449, 16
        %v596 = vpop.permute.xlu0 %595
        %597 = vrot.lane.b32.xlu0 %v450, 16
        %v598 = vpop.permute.xlu0 %597
        %599 = vrot.lane.b32.xlu0 %v451, 16
        %v600 = vpop.permute.xlu0 %599
        %601 = vrot.lane.b32.xlu0 %v452, 16
        %v602 = vpop.permute.xlu0 %601
        %603 = vrot.lane.b32.xlu0 %v453, 16
        %v604 = vpop.permute.xlu0 %603
        %605 = vrot.lane.b32.xlu0 %v454, 16
        %v606 = vpop.permute.xlu0 %605
        %607 = vrot.lane.b32.xlu0 %v455, 16
        %v608 = vpop.permute.xlu0 %607
        %625 = vrot.lane.b32.xlu0 %v456, 20
        %v626 = vpop.permute.xlu0 %625
        %627 = vrot.lane.b32.xlu0 %v457, 20
        %v628 = vpop.permute.xlu0 %627
        %629 = vrot.lane.b32.xlu0 %v458, 20
        %v630 = vpop.permute.xlu0 %629
        %631 = vrot.lane.b32.xlu0 %v459, 20
        %v632 = vpop.permute.xlu0 %631
        %633 = vrot.lane.b32.xlu0 %v460, 20
        %v634 = vpop.permute.xlu0 %633
        %635 = vrot.lane.b32.xlu0 %v461, 20
        %v636 = vpop.permute.xlu0 %635
        %637 = vrot.lane.b32.xlu0 %v462, 20
        %v638 = vpop.permute.xlu0 %637
        %639 = vrot.lane.b32.xlu0 %v463, 20
        %v640 = vpop.permute.xlu0 %639
        %657 = vrot.lane.b32.xlu0 %v465, 24
        %v658 = vpop.permute.xlu0 %657
        %659 = vrot.lane.b32.xlu0 %v466, 24
        %v660 = vpop.permute.xlu0 %659
        %661 = vrot.lane.b32.xlu0 %v467, 24
        %v662 = vpop.permute.xlu0 %661
        %663 = vrot.lane.b32.xlu0 %v468, 24
        %v664 = vpop.permute.xlu0 %663
        %665 = vrot.lane.b32.xlu0 %v469, 24
        %v666 = vpop.permute.xlu0 %665
        %667 = vrot.lane.b32.xlu0 %v470, 24
        %v668 = vpop.permute.xlu0 %667
        %669 = vrot.lane.b32.xlu0 %v471, 24
        %v670 = vpop.permute.xlu0 %669
        %671 = vrot.lane.b32.xlu0 %v472, 24
        %v672 = vpop.permute.xlu0 %671
        %689 = vrot.lane.b32.xlu0 %v473, 28
        %v690 = vpop.permute.xlu0 %689
        %691 = vrot.lane.b32.xlu0 %v474, 28
        %v692 = vpop.permute.xlu0 %691
        %693 = vrot.lane.b32.xlu0 %v475, 28
        %v694 = vpop.permute.xlu0 %693
        %695 = vrot.lane.b32.xlu0 %v476, 28
        %v696 = vpop.permute.xlu0 %695
        %697 = vrot.lane.b32.xlu0 %v477, 28
        %v698 = vpop.permute.xlu0 %697
        %699 = vrot.lane.b32.xlu0 %v478, 28
        %v700 = vpop.permute.xlu0 %699
        %701 = vrot.lane.b32.xlu0 %v479, 28
        %v702 = vpop.permute.xlu0 %701
        %703 = vrot.lane.b32.xlu0 %v480, 28
        %v704 = vpop.permute.xlu0 %703
        %721 = vrot.lane.b32.xlu0 %v481, 32
        %v722 = vpop.permute.xlu0 %721
        %723 = vrot.lane.b32.xlu0 %v482, 32
        %v724 = vpop.permute.xlu0 %723
        %725 = vrot.lane.b32.xlu0 %v483, 32
        %v726 = vpop.permute.xlu0 %725
        %727 = vrot.lane.b32.xlu0 %v484, 32
        %v728 = vpop.permute.xlu0 %727
        %729 = vrot.lane.b32.xlu0 %v485, 32
        %v730 = vpop.permute.xlu0 %729
        %731 = vrot.lane.b32.xlu0 %v486, 32
        %v732 = vpop.permute.xlu0 %731
        %733 = vrot.lane.b32.xlu0 %v487, 32
        %v734 = vpop.permute.xlu0 %733
        %735 = vrot.lane.b32.xlu0 %v488, 32
        %v736 = vpop.permute.xlu0 %735
        %v745 = vsel %vm312, %v416, %v498
        %v746 = vsel %vm312, %v417, %v500
        %v747 = vsel %vm312, %v418, %v502
        %v748 = vsel %vm312, %v419, %v504
        %v749 = vsel %vm312, %v420, %v506
        %v750 = vsel %vm312, %v421, %v508
        %v751 = vsel %vm312, %v422, %v510
        %v752 = vsel %vm312, %v423, %v512
        %v753 = vsel %vm319, %v745, %v530
        %v754 = vsel %vm319, %v746, %v532
        %v755 = vsel %vm319, %v747, %v534
        %v756 = vsel %vm319, %v748, %v536
        %v757 = vsel %vm319, %v749, %v538
        %v758 = vsel %vm319, %v750, %v540
        %v759 = vsel %vm319, %v751, %v542
        %v760 = vsel %vm319, %v752, %v544
        %vm761 = vcmask 97280
        %v762 = vsel %vm761, %v753, %v562
        %v763 = vsel %vm761, %v754, %v564
        %v764 = vsel %vm761, %v755, %v566
        %v765 = vsel %vm761, %v756, %v568
        %v766 = vsel %vm761, %v757, %v570
        %v767 = vsel %vm761, %v758, %v572
        %v768 = vsel %vm761, %v759, %v574
        %v769 = vsel %vm761, %v760, %v576
        %vm770 = vcmask 130048
        %v771 = vsel %vm770, %v762, %v594
        %v772 = vsel %vm770, %v763, %v596
        %v773 = vsel %vm770, %v764, %v598
        %v774 = vsel %vm770, %v765, %v600
        %v775 = vsel %vm770, %v766, %v602
        %v776 = vsel %vm770, %v767, %v604
        %v777 = vsel %vm770, %v768, %v606
        %v778 = vsel %vm770, %v769, %v608
        %vm779 = vcmask 162816
        %v780 = vsel %vm779, %v771, %v626
        %v781 = vsel %vm779, %v772, %v628
        %v782 = vsel %vm779, %v773, %v630
        %v783 = vsel %vm779, %v774, %v632
        %v784 = vsel %vm779, %v775, %v634
        %v785 = vsel %vm779, %v776, %v636
        %v786 = vsel %vm779, %v777, %v638
        %v787 = vsel %vm779, %v778, %v640
        %vm788 = vcmask 195584
        %v789 = vsel %vm788, %v780, %v658
        %v790 = vsel %vm788, %v781, %v660
        %v791 = vsel %vm788, %v782, %v662
        %v792 = vsel %vm788, %v783, %v664
        %v793 = vsel %vm788, %v784, %v666
        %v794 = vsel %vm788, %v785, %v668
        %v795 = vsel %vm788, %v786, %v670
        %v796 = vsel %vm788, %v787, %v672
        %vm797 = vcmask 228352
        %v798 = vsel %vm797, %v789, %v690
        %v799 = vsel %vm797, %v790, %v692
        %v800 = vsel %vm797, %v791, %v694
        %v801 = vsel %vm797, %v792, %v696
        %v802 = vsel %vm797, %v793, %v698
        %v803 = vsel %vm797, %v794, %v700
        %v804 = vsel %vm797, %v795, %v702
        %v805 = vsel %vm797, %v796, %v704
        %vm806 = vcmask 261120
        %v807 = vsel %vm806, %v798, %v722
        %v808 = vsel %vm806, %v799, %v724
        %v809 = vsel %vm806, %v800, %v726
        %v810 = vsel %vm806, %v801, %v728
        %v811 = vsel %vm806, %v802, %v730
        %v812 = vsel %vm806, %v803, %v732
        %v813 = vsel %vm806, %v804, %v734
        %v814 = vsel %vm806, %v805, %v736
        %v815 = vld [vmem:[%s1] sm:$0xff]
        %v816 = vld [vmem:[%s1 + $0x8] sm:$0xff]
        %v817 = vld [vmem:[%s1 + $0x10] sm:$0xff]
        %v818 = vld [vmem:[%s1 + $0x18] sm:$0xff]
        %v819 = vld [vmem:[%s1 + $0x20] sm:$0xf]
        %vm820 = vcmask 293888
        %v822 = vsel %vm820, %v807, 0
        %v825 = vsel %vm820, %v808, 0
        %v828 = vsel %vm820, %v809, 0
        %v831 = vsel %vm820, %v810, 0
        %v834 = vsel %vm820, %v811, 0
        %v837 = vsel %vm820, %v812, 0
        %v840 = vsel %vm820, %v813, 0
        %v843 = vsel %vm820, %v814, 0
        %vm845 = vcmask 1043456
        %v847 = vsel %vm845, %v819, 0
        %849 = vmatprep.subr.mxu0 0.0
        %850 = vmatpush1.msra.mxu0 0.0
        %851 = vmatprep.subr.mxu0 0.0
        %852 = vmatpush1.msra.mxu0 0.0
        %853 = vmatprep.subr.mxu0 0.0
        %854 = vmatpush1.msra.mxu0 0.0
        %855 = vmatprep.subr.mxu0 0.0
        %856 = vmatpush1.msra.mxu0 0.0
        %857 = vmatprep.subr.mxu0 0.0
        %858 = vmatpush1.msra.mxu0 0.0
        %859 = vmatprep.subr.mxu0 0.0
        %860 = vmatpush1.msra.mxu0 0.0
        %861 = vmatprep.subr.mxu0 0.0
        %862 = vmatpush1.msra.mxu0 0.0
        %863 = vmatprep.subr.mxu0 0.0
        %864 = vmatpush1.msra.mxu0 0.0
        %865 = vmatprep.subr.mxu0 0.0
        %866 = vmatpush1.msra.mxu0 0.0
        %867 = vmatprep.subr.mxu0 0.0
        %868 = vmatpush1.msra.mxu0 0.0
        %869 = vmatprep.subr.mxu0 0.0
        %870 = vmatpush1.msra.mxu0 0.0
        %871 = vmatprep.subr.mxu0 0.0
        %872 = vmatpush1.msra.mxu0 %v847
        %873 = vmatprep.subr.mxu0 0.0
        %874 = vmatpush1.msra.mxu0 %v818
        %875 = vmatprep.subr.mxu0 0.0
        %876 = vmatpush1.msra.mxu0 %v817
        %877 = vmatprep.subr.mxu0 0.0
        %878 = vmatpush1.msra.mxu0 %v816
        %879 = vmatprep.subr.mxu0 0.0
        %880 = vmatpush1.msra.mxu0 %v815
        %881 = vmatprep.subr.mxu0 0.0
        %882 = vmatpush2.msra.mxu0 0.0
        %883 = vmatprep.subr.mxu0 0.0
        %884 = vmatpush2.msra.mxu0 0.0
        %885 = vmatprep.subr.mxu0 0.0
        %886 = vmatpush2.msra.mxu0 0.0
        %887 = vmatprep.subr.mxu0 0.0
        %888 = vmatpush2.msra.mxu0 0.0
        %889 = vmatprep.subr.mxu0 0.0
        %890 = vmatpush2.msra.mxu0 0.0
        %891 = vmatprep.subr.mxu0 0.0
        %892 = vmatpush2.msra.mxu0 0.0
        %893 = vmatprep.subr.mxu0 0.0
        %894 = vmatpush2.msra.mxu0 0.0
        %895 = vmatprep.subr.mxu0 0.0
        %896 = vmatpush2.msra.mxu0 0.0
        %897 = vmatprep.subr.mxu0 0.0
        %898 = vmatpush2.msra.mxu0 0.0
        %899 = vmatprep.subr.mxu0 0.0
        %900 = vmatpush2.msra.mxu0 0.0
        %901 = vmatprep.subr.mxu0 0.0
        %902 = vmatpush2.msra.mxu0 0.0
        %903 = vmatprep.subr.mxu0 0.0
        %904 = vmatpush2.msra.mxu0 0.0
        %905 = vmatprep.subr.mxu0 0.0
        %906 = vmatpush2.msra.mxu0 0.0
        %907 = vmatprep.subr.mxu0 0.0
        %908 = vmatpush2.msra.mxu0 0.0
        %909 = vmatprep.subr.mxu0 0.0
        %910 = vmatpush2.msra.mxu0 0.0
        %911 = vmatprep.subr.mxu0 0.0
        %912 = vmatpush2.msra.mxu0 0.0
        %913 = vmatprep.mubr.f32.mxu0 0.0
        %914 = vmatmul.mubr.f32.gmra.mxu0 %v822
        %v915 = vpop.f32.mrf.mxu0
        %v916 = vadd.f32 0.0, %v915
        %v917 = vpop.f32.mrf.mxu0
        %918 = vmatprep.mubr.f32.mxu0 0.0
        %919 = vmatmul.mubr.f32.gmra.mxu0 %v825
        %v920 = vpop.f32.mrf.mxu0
        %v921 = vadd.f32 0.0, %v920
        %v922 = vpop.f32.mrf.mxu0
        %923 = vmatprep.mubr.f32.mxu0 0.0
        %924 = vmatmul.mubr.f32.gmra.mxu0 %v828
        %v925 = vpop.f32.mrf.mxu0
        %v926 = vadd.f32 0.0, %v925
        %v927 = vpop.f32.mrf.mxu0
        %928 = vmatprep.mubr.f32.mxu0 0.0
        %929 = vmatmul.mubr.f32.gmra.mxu0 %v831
        %v930 = vpop.f32.mrf.mxu0
        %v931 = vadd.f32 0.0, %v930
        %v932 = vpop.f32.mrf.mxu0
        %933 = vmatprep.mubr.f32.mxu0 0.0
        %934 = vmatmul.mubr.f32.gmra.mxu0 %v834
        %v935 = vpop.f32.mrf.mxu0
        %v936 = vadd.f32 0.0, %v935
        %v937 = vpop.f32.mrf.mxu0
        %938 = vmatprep.mubr.f32.mxu0 0.0
        %939 = vmatmul.mubr.f32.gmra.mxu0 %v837
        %v940 = vpop.f32.mrf.mxu0
        %v941 = vadd.f32 0.0, %v940
        %v942 = vpop.f32.mrf.mxu0
        %943 = vmatprep.mubr.f32.mxu0 0.0
        %944 = vmatmul.mubr.f32.gmra.mxu0 %v840
        %v945 = vpop.f32.mrf.mxu0
        %v946 = vadd.f32 0.0, %v945
        %v947 = vpop.f32.mrf.mxu0
        %948 = vmatprep.mubr.f32.mxu0 0.0
        %949 = vmatmul.mubr.f32.gmra.mxu0 %v843
        %v950 = vpop.f32.mrf.mxu0
        %v951 = vadd.f32 0.0, %v950
        %v952 = vpop.f32.mrf.mxu0
        %953 = vdwg.mxu0
        %v954 = vld [vmem:[%s2] sm:$0x1]
        %v956 = vlaneseq
        %v957 = vshrl.u32 %v956, 7
        %v958 = vsub.s32 0, %v957
        %v959 = vrot.slane %v954, %v958
        %v961 = vmul.f32 %v916, %v959
        %v962 = vmul.f32 %v921, %v959
        %v963 = vmul.f32 %v926, %v959
        %v964 = vmul.f32 %v931, %v959
        %v965 = vmul.f32 %v936, %v959
        %v966 = vmul.f32 %v941, %v959
        %v967 = vmul.f32 %v946, %v959
        %v968 = vmul.f32 %v951, %v959
        %v969 = vld [vmem:[%s3] sm:$0x1]
        %v971 = vlaneseq
        %v972 = vshrl.u32 %v971, 7
        %v973 = vsub.s32 0, %v972
        %v974 = vrot.slane %v969, %v973
        %v976 = vadd.f32 %v961, %v974
        %v977 = vadd.f32 %v962, %v974
        %v978 = vadd.f32 %v963, %v974
        %v979 = vadd.f32 %v964, %v974
        %v980 = vadd.f32 %v965, %v974
        %v981 = vadd.f32 %v966, %v974
        %v982 = vadd.f32 %v967, %v974
        %v983 = vadd.f32 %v968, %v974
        %v984 = vmax.f32 %v976, 0.0
        %v985 = vmax.f32 %v977, 0.0
        %v986 = vmax.f32 %v978, 0.0
        %v987 = vmax.f32 %v979, 0.0
        %v988 = vmax.f32 %v980, 0.0
        %v989 = vmax.f32 %v981, 0.0
        %v990 = vmax.f32 %v982, 0.0
        %v991 = vmax.f32 %v983, 0.0
        %s992 = scalar_lea.vmem [#allocation3], 16
        %993 = vst.msk [vmem:[%s992 + $0x1] sm:$0xff] %vm319, %v984
        %994 = vst.msk [vmem:[%s992 + $0x11] sm:$0xff] %vm319, %v985
        %995 = vst.msk [vmem:[%s992 + $0x21] sm:$0xff] %vm319, %v986
        %996 = vst.msk [vmem:[%s992 + $0x31] sm:$0xff] %vm319, %v987
        %997 = vst.msk [vmem:[%s992 + $0x41] sm:$0xff] %vm319, %v988
        %998 = vst.msk [vmem:[%s992 + $0x51] sm:$0xff] %vm319, %v989
        %999 = vst.msk [vmem:[%s992 + $0x61] sm:$0xff] %vm319, %v990
        %1000 = vst.msk [vmem:[%s992 + $0x71] sm:$0xff] %vm319, %v991
        %vm1001 = vcmask 57344
        %1002 = vst.msk [vmem:[%s992] sm:$0x1] %vm1001, 0.0
        %1003 = vst.msk [vmem:[%s992 + $0x10] sm:$0x1] %vm1001, 0.0
        %1004 = vst.msk [vmem:[%s992 + $0x20] sm:$0x1] %vm1001, 0.0
        %1005 = vst.msk [vmem:[%s992 + $0x30] sm:$0x1] %vm1001, 0.0
        %1006 = vst.msk [vmem:[%s992 + $0x40] sm:$0x1] %vm1001, 0.0
        %1007 = vst.msk [vmem:[%s992 + $0x50] sm:$0x1] %vm1001, 0.0
        %1008 = vst.msk [vmem:[%s992 + $0x60] sm:$0x1] %vm1001, 0.0
        %1009 = vst.msk [vmem:[%s992 + $0x70] sm:$0x1] %vm1001, 0.0
        %1010 = vst.msk [vmem:[%s992 + $0x9] sm:$0x1] %vm1001, 0.0
        %1011 = vst.msk [vmem:[%s992 + $0x19] sm:$0x1] %vm1001, 0.0
        %1012 = vst.msk [vmem:[%s992 + $0x29] sm:$0x1] %vm1001, 0.0
        %1013 = vst.msk [vmem:[%s992 + $0x39] sm:$0x1] %vm1001, 0.0
        %1014 = vst.msk [vmem:[%s992 + $0x49] sm:$0x1] %vm1001, 0.0
        %1015 = vst.msk [vmem:[%s992 + $0x59] sm:$0x1] %vm1001, 0.0
        %1016 = vst.msk [vmem:[%s992 + $0x69] sm:$0x1] %vm1001, 0.0
        %1017 = vst.msk [vmem:[%s992 + $0x79] sm:$0x1] %vm1001, 0.0
        %v1018 = vld [vmem:[#allocation3] sm:$0xff]
        %v1019 = vld [vmem:[#allocation3 + $0x10] sm:$0xff]
        %v1020 = vld [vmem:[#allocation3 + $0x20] sm:$0xff]
        %v1021 = vld [vmem:[#allocation3 + $0x30] sm:$0xff]
        %v1022 = vld [vmem:[#allocation3 + $0x40] sm:$0xff]
        %v1023 = vld [vmem:[#allocation3 + $0x50] sm:$0xff]
        %v1024 = vld [vmem:[#allocation3 + $0x60] sm:$0xff]
        %v1025 = vld [vmem:[#allocation3 + $0x70] sm:$0xff]
        %v1026 = vld [vmem:[#allocation3 + $0x1] sm:$0xff]
        %v1027 = vld [vmem:[#allocation3 + $0x11] sm:$0xff]
        %v1028 = vld [vmem:[#allocation3 + $0x21] sm:$0xff]
        %v1029 = vld [vmem:[#allocation3 + $0x31] sm:$0xff]
        %v1030 = vld [vmem:[#allocation3 + $0x41] sm:$0xff]
        %v1031 = vld [vmem:[#allocation3 + $0x51] sm:$0xff]
        %v1032 = vld [vmem:[#allocation3 + $0x61] sm:$0xff]
        %v1033 = vld [vmem:[#allocation3 + $0x71] sm:$0xff]
        %v1034 = vld [vmem:[#allocation3 + $0x2] sm:$0xff]
        %v1035 = vld [vmem:[#allocation3 + $0x12] sm:$0xff]
        %v1036 = vld [vmem:[#allocation3 + $0x22] sm:$0xff]
        %v1037 = vld [vmem:[#allocation3 + $0x32] sm:$0xff]
        %v1038 = vld [vmem:[#allocation3 + $0x42] sm:$0xff]
        %v1039 = vld [vmem:[#allocation3 + $0x52] sm:$0xff]
        %v1040 = vld [vmem:[#allocation3 + $0x62] sm:$0xff]
        %v1041 = vld [vmem:[#allocation3 + $0x72] sm:$0xff]
        %v1042 = vld [vmem:[%s992] sm:$0xff]
        %v1043 = vld [vmem:[%s992 + $0x10] sm:$0xff]
        %v1044 = vld [vmem:[%s992 + $0x20] sm:$0xff]
        %v1045 = vld [vmem:[%s992 + $0x30] sm:$0xff]
        %v1046 = vld [vmem:[%s992 + $0x40] sm:$0xff]
        %v1047 = vld [vmem:[%s992 + $0x50] sm:$0xff]
        %v1048 = vld [vmem:[%s992 + $0x60] sm:$0xff]
        %v1049 = vld [vmem:[%s992 + $0x70] sm:$0xff]
        %v1050 = vld [vmem:[%s992 + $0x1] sm:$0xff]
        %v1051 = vld [vmem:[%s992 + $0x11] sm:$0xff]
        %v1052 = vld [vmem:[%s992 + $0x21] sm:$0xff]
        %v1053 = vld [vmem:[%s992 + $0x31] sm:$0xff]
        %v1054 = vld [vmem:[%s992 + $0x41] sm:$0xff]
        %v1055 = vld [vmem:[%s992 + $0x51] sm:$0xff]
        %v1056 = vld [vmem:[%s992 + $0x61] sm:$0xff]
        %v1057 = vld [vmem:[%s992 + $0x71] sm:$0xff]
        %v1058 = vld [vmem:[%s992 + $0x2] sm:$0xff]
        %v1059 = vld [vmem:[%s992 + $0x12] sm:$0xff]
        %v1060 = vld [vmem:[%s992 + $0x22] sm:$0xff]
        %v1061 = vld [vmem:[%s992 + $0x32] sm:$0xff]
        %v1062 = vld [vmem:[%s992 + $0x42] sm:$0xff]
        %v1063 = vld [vmem:[%s992 + $0x52] sm:$0xff]
        %v1064 = vld [vmem:[%s992 + $0x62] sm:$0xff]
        %v1065 = vld [vmem:[%s992 + $0x72] sm:$0xff]
        %s1066 = scalar_lea.vmem [#allocation3], 32
        %v1067 = vld [vmem:[%s1066] sm:$0xff]
        %v1068 = vld [vmem:[%s1066 + $0x10] sm:$0xff]
        %v1069 = vld [vmem:[%s1066 + $0x20] sm:$0xff]
        %v1070 = vld [vmem:[%s1066 + $0x30] sm:$0xff]
        %v1071 = vld [vmem:[%s1066 + $0x40] sm:$0xff]
        %v1072 = vld [vmem:[%s1066 + $0x50] sm:$0xff]
        %v1073 = vld [vmem:[%s1066 + $0x60] sm:$0xff]
        %v1074 = vld [vmem:[%s1066 + $0x70] sm:$0xff]
        %v1075 = vld [vmem:[%s1066 + $0x1] sm:$0xff]
        %v1076 = vld [vmem:[%s1066 + $0x11] sm:$0xff]
        %v1077 = vld [vmem:[%s1066 + $0x21] sm:$0xff]
        %v1078 = vld [vmem:[%s1066 + $0x31] sm:$0xff]
        %v1079 = vld [vmem:[%s1066 + $0x41] sm:$0xff]
        %v1080 = vld [vmem:[%s1066 + $0x51] sm:$0xff]
        %v1081 = vld [vmem:[%s1066 + $0x61] sm:$0xff]
        %v1082 = vld [vmem:[%s1066 + $0x71] sm:$0xff]
        %v1083 = vld [vmem:[%s1066 + $0x2] sm:$0xff]
        %v1084 = vld [vmem:[%s1066 + $0x12] sm:$0xff]
        %v1085 = vld [vmem:[%s1066 + $0x22] sm:$0xff]
        %v1086 = vld [vmem:[%s1066 + $0x32] sm:$0xff]
        %v1087 = vld [vmem:[%s1066 + $0x42] sm:$0xff]
        %v1088 = vld [vmem:[%s1066 + $0x52] sm:$0xff]
        %v1089 = vld [vmem:[%s1066 + $0x62] sm:$0xff]
        %v1090 = vld [vmem:[%s1066 + $0x72] sm:$0xff]
        %1099 = vrot.lane.b32.xlu0 %v1026, 8
        %v1100 = vpop.permute.xlu0 %1099
        %1101 = vrot.lane.b32.xlu0 %v1027, 8
        %v1102 = vpop.permute.xlu0 %1101
        %1103 = vrot.lane.b32.xlu0 %v1028, 8
        %v1104 = vpop.permute.xlu0 %1103
        %1105 = vrot.lane.b32.xlu0 %v1029, 8
        %v1106 = vpop.permute.xlu0 %1105
        %1107 = vrot.lane.b32.xlu0 %v1030, 8
        %v1108 = vpop.permute.xlu0 %1107
        %1109 = vrot.lane.b32.xlu0 %v1031, 8
        %v1110 = vpop.permute.xlu0 %1109
        %1111 = vrot.lane.b32.xlu0 %v1032, 8
        %v1112 = vpop.permute.xlu0 %1111
        %1113 = vrot.lane.b32.xlu0 %v1033, 8
        %v1114 = vpop.permute.xlu0 %1113
        %1131 = vrot.lane.b32.xlu0 %v1034, 16
        %v1132 = vpop.permute.xlu0 %1131
        %1133 = vrot.lane.b32.xlu0 %v1035, 16
        %v1134 = vpop.permute.xlu0 %1133
        %1135 = vrot.lane.b32.xlu0 %v1036, 16
        %v1136 = vpop.permute.xlu0 %1135
        %1137 = vrot.lane.b32.xlu0 %v1037, 16
        %v1138 = vpop.permute.xlu0 %1137
        %1139 = vrot.lane.b32.xlu0 %v1038, 16
        %v1140 = vpop.permute.xlu0 %1139
        %1141 = vrot.lane.b32.xlu0 %v1039, 16
        %v1142 = vpop.permute.xlu0 %1141
        %1143 = vrot.lane.b32.xlu0 %v1040, 16
        %v1144 = vpop.permute.xlu0 %1143
        %1145 = vrot.lane.b32.xlu0 %v1041, 16
        %v1146 = vpop.permute.xlu0 %1145
        %1163 = vrot.lane.b32.xlu0 %v1042, 24
        %v1164 = vpop.permute.xlu0 %1163
        %1165 = vrot.lane.b32.xlu0 %v1043, 24
        %v1166 = vpop.permute.xlu0 %1165
        %1167 = vrot.lane.b32.xlu0 %v1044, 24
        %v1168 = vpop.permute.xlu0 %1167
        %1169 = vrot.lane.b32.xlu0 %v1045, 24
        %v1170 = vpop.permute.xlu0 %1169
        %1171 = vrot.lane.b32.xlu0 %v1046, 24
        %v1172 = vpop.permute.xlu0 %1171
        %1173 = vrot.lane.b32.xlu0 %v1047, 24
        %v1174 = vpop.permute.xlu0 %1173
        %1175 = vrot.lane.b32.xlu0 %v1048, 24
        %v1176 = vpop.permute.xlu0 %1175
        %1177 = vrot.lane.b32.xlu0 %v1049, 24
        %v1178 = vpop.permute.xlu0 %1177
        %1195 = vrot.lane.b32.xlu0 %v1050, 32
        %v1196 = vpop.permute.xlu0 %1195
        %1197 = vrot.lane.b32.xlu0 %v1051, 32
        %v1198 = vpop.permute.xlu0 %1197
        %1199 = vrot.lane.b32.xlu0 %v1052, 32
        %v1200 = vpop.permute.xlu0 %1199
        %1201 = vrot.lane.b32.xlu0 %v1053, 32
        %v1202 = vpop.permute.xlu0 %1201
        %1203 = vrot.lane.b32.xlu0 %v1054, 32
        %v1204 = vpop.permute.xlu0 %1203
        %1205 = vrot.lane.b32.xlu0 %v1055, 32
        %v1206 = vpop.permute.xlu0 %1205
        %1207 = vrot.lane.b32.xlu0 %v1056, 32
        %v1208 = vpop.permute.xlu0 %1207
        %1209 = vrot.lane.b32.xlu0 %v1057, 32
        %v1210 = vpop.permute.xlu0 %1209
        %1227 = vrot.lane.b32.xlu0 %v1058, 40
        %v1228 = vpop.permute.xlu0 %1227
        %1229 = vrot.lane.b32.xlu0 %v1059, 40
        %v1230 = vpop.permute.xlu0 %1229
        %1231 = vrot.lane.b32.xlu0 %v1060, 40
        %v1232 = vpop.permute.xlu0 %1231
        %1233 = vrot.lane.b32.xlu0 %v1061, 40
        %v1234 = vpop.permute.xlu0 %1233
        %1235 = vrot.lane.b32.xlu0 %v1062, 40
        %v1236 = vpop.permute.xlu0 %1235
        %1237 = vrot.lane.b32.xlu0 %v1063, 40
        %v1238 = vpop.permute.xlu0 %1237
        %1239 = vrot.lane.b32.xlu0 %v1064, 40
        %v1240 = vpop.permute.xlu0 %1239
        %1241 = vrot.lane.b32.xlu0 %v1065, 40
        %v1242 = vpop.permute.xlu0 %1241
        %1259 = vrot.lane.b32.xlu0 %v1067, 48
        %v1260 = vpop.permute.xlu0 %1259
        %1261 = vrot.lane.b32.xlu0 %v1068, 48
        %v1262 = vpop.permute.xlu0 %1261
        %1263 = vrot.lane.b32.xlu0 %v1069, 48
        %v1264 = vpop.permute.xlu0 %1263
        %1265 = vrot.lane.b32.xlu0 %v1070, 48
        %v1266 = vpop.permute.xlu0 %1265
        %1267 = vrot.lane.b32.xlu0 %v1071, 48
        %v1268 = vpop.permute.xlu0 %1267
        %1269 = vrot.lane.b32.xlu0 %v1072, 48
        %v1270 = vpop.permute.xlu0 %1269
        %1271 = vrot.lane.b32.xlu0 %v1073, 48
        %v1272 = vpop.permute.xlu0 %1271
        %1273 = vrot.lane.b32.xlu0 %v1074, 48
        %v1274 = vpop.permute.xlu0 %1273
        %1291 = vrot.lane.b32.xlu0 %v1075, 56
        %v1292 = vpop.permute.xlu0 %1291
        %1293 = vrot.lane.b32.xlu0 %v1076, 56
        %v1294 = vpop.permute.xlu0 %1293
        %1295 = vrot.lane.b32.xlu0 %v1077, 56
        %v1296 = vpop.permute.xlu0 %1295
        %1297 = vrot.lane.b32.xlu0 %v1078, 56
        %v1298 = vpop.permute.xlu0 %1297
        %1299 = vrot.lane.b32.xlu0 %v1079, 56
        %v1300 = vpop.permute.xlu0 %1299
        %1301 = vrot.lane.b32.xlu0 %v1080, 56
        %v1302 = vpop.permute.xlu0 %1301
        %1303 = vrot.lane.b32.xlu0 %v1081, 56
        %v1304 = vpop.permute.xlu0 %1303
        %1305 = vrot.lane.b32.xlu0 %v1082, 56
        %v1306 = vpop.permute.xlu0 %1305
        %1323 = vrot.lane.b32.xlu0 %v1083, 64
        %v1324 = vpop.permute.xlu0 %1323
        %1325 = vrot.lane.b32.xlu0 %v1084, 64
        %v1326 = vpop.permute.xlu0 %1325
        %1327 = vrot.lane.b32.xlu0 %v1085, 64
        %v1328 = vpop.permute.xlu0 %1327
        %1329 = vrot.lane.b32.xlu0 %v1086, 64
        %v1330 = vpop.permute.xlu0 %1329
        %1331 = vrot.lane.b32.xlu0 %v1087, 64
        %v1332 = vpop.permute.xlu0 %1331
        %1333 = vrot.lane.b32.xlu0 %v1088, 64
        %v1334 = vpop.permute.xlu0 %1333
        %1335 = vrot.lane.b32.xlu0 %v1089, 64
        %v1336 = vpop.permute.xlu0 %1335
        %1337 = vrot.lane.b32.xlu0 %v1090, 64
        %v1338 = vpop.permute.xlu0 %1337
        %v1347 = vsel %vm319, %v1018, %v1100
        %v1348 = vsel %vm319, %v1019, %v1102
        %v1349 = vsel %vm319, %v1020, %v1104
        %v1350 = vsel %vm319, %v1021, %v1106
        %v1351 = vsel %vm319, %v1022, %v1108
        %v1352 = vsel %vm319, %v1023, %v1110
        %v1353 = vsel %vm319, %v1024, %v1112
        %v1354 = vsel %vm319, %v1025, %v1114
        %v1355 = vsel %vm770, %v1347, %v1132
        %v1356 = vsel %vm770, %v1348, %v1134
        %v1357 = vsel %vm770, %v1349, %v1136
        %v1358 = vsel %vm770, %v1350, %v1138
        %v1359 = vsel %vm770, %v1351, %v1140
        %v1360 = vsel %vm770, %v1352, %v1142
        %v1361 = vsel %vm770, %v1353, %v1144
        %v1362 = vsel %vm770, %v1354, %v1146
        %v1363 = vsel %vm788, %v1355, %v1164
        %v1364 = vsel %vm788, %v1356, %v1166
        %v1365 = vsel %vm788, %v1357, %v1168
        %v1366 = vsel %vm788, %v1358, %v1170
        %v1367 = vsel %vm788, %v1359, %v1172
        %v1368 = vsel %vm788, %v1360, %v1174
        %v1369 = vsel %vm788, %v1361, %v1176
        %v1370 = vsel %vm788, %v1362, %v1178
        %v1371 = vsel %vm806, %v1363, %v1196
        %v1372 = vsel %vm806, %v1364, %v1198
        %v1373 = vsel %vm806, %v1365, %v1200
        %v1374 = vsel %vm806, %v1366, %v1202
        %v1375 = vsel %vm806, %v1367, %v1204
        %v1376 = vsel %vm806, %v1368, %v1206
        %v1377 = vsel %vm806, %v1369, %v1208
        %v1378 = vsel %vm806, %v1370, %v1210
        %vm1379 = vcmask 326656
        %v1380 = vsel %vm1379, %v1371, %v1228
        %v1381 = vsel %vm1379, %v1372, %v1230
        %v1382 = vsel %vm1379, %v1373, %v1232
        %v1383 = vsel %vm1379, %v1374, %v1234
        %v1384 = vsel %vm1379, %v1375, %v1236
        %v1385 = vsel %vm1379, %v1376, %v1238
        %v1386 = vsel %vm1379, %v1377, %v1240
        %v1387 = vsel %vm1379, %v1378, %v1242
        %vm1388 = vcmask 392192
        %v1389 = vsel %vm1388, %v1380, %v1260
        %v1390 = vsel %vm1388, %v1381, %v1262
        %v1391 = vsel %vm1388, %v1382, %v1264
        %v1392 = vsel %vm1388, %v1383, %v1266
        %v1393 = vsel %vm1388, %v1384, %v1268
        %v1394 = vsel %vm1388, %v1385, %v1270
        %v1395 = vsel %vm1388, %v1386, %v1272
        %v1396 = vsel %vm1388, %v1387, %v1274
        %vm1397 = vcmask 457728
        %v1398 = vsel %vm1397, %v1389, %v1292
        %v1399 = vsel %vm1397, %v1390, %v1294
        %v1400 = vsel %vm1397, %v1391, %v1296
        %v1401 = vsel %vm1397, %v1392, %v1298
        %v1402 = vsel %vm1397, %v1393, %v1300
        %v1403 = vsel %vm1397, %v1394, %v1302
        %v1404 = vsel %vm1397, %v1395, %v1304
        %v1405 = vsel %vm1397, %v1396, %v1306
        %vm1406 = vcmask 523264
        %v1407 = vsel %vm1406, %v1398, %v1324
        %v1408 = vsel %vm1406, %v1399, %v1326
        %v1409 = vsel %vm1406, %v1400, %v1328
        %v1410 = vsel %vm1406, %v1401, %v1330
        %v1411 = vsel %vm1406, %v1402, %v1332
        %v1412 = vsel %vm1406, %v1403, %v1334
        %v1413 = vsel %vm1406, %v1404, %v1336
        %v1414 = vsel %vm1406, %v1405, %v1338
        %v1415 = vld [vmem:[#allocation7] sm:$0xff]
        %v1416 = vld [vmem:[#allocation7 + $0x8] sm:$0xff]
        %v1417 = vld [vmem:[#allocation7 + $0x10] sm:$0xff]
        %v1418 = vld [vmem:[#allocation7 + $0x18] sm:$0xff]
        %v1419 = vld [vmem:[#allocation7 + $0x20] sm:$0xff]
        %v1420 = vld [vmem:[#allocation7 + $0x28] sm:$0xff]
        %v1421 = vld [vmem:[#allocation7 + $0x30] sm:$0xff]
        %v1422 = vld [vmem:[#allocation7 + $0x38] sm:$0xff]
        %v1423 = vld [vmem:[#allocation7 + $0x40] sm:$0xff]
        %vm1424 = vcmask 588800
        %v1426 = vsel %vm1424, %v1407, 0
        %v1429 = vsel %vm1424, %v1408, 0
        %v1432 = vsel %vm1424, %v1409, 0
        %v1435 = vsel %vm1424, %v1410, 0
        %v1438 = vsel %vm1424, %v1411, 0
        %v1441 = vsel %vm1424, %v1412, 0
        %v1444 = vsel %vm1424, %v1413, 0
        %v1447 = vsel %vm1424, %v1414, 0
        %1449 = vmatprep.subr.mxu0 0.0
        %1450 = vmatpush1.msra.mxu0 0.0
        %1451 = vmatprep.subr.mxu0 0.0
        %1452 = vmatpush1.msra.mxu0 0.0
        %1453 = vmatprep.subr.mxu0 0.0
        %1454 = vmatpush1.msra.mxu0 0.0
        %1455 = vmatprep.subr.mxu0 0.0
        %1456 = vmatpush1.msra.mxu0 0.0
        %1457 = vmatprep.subr.mxu0 0.0
        %1458 = vmatpush1.msra.mxu0 0.0
        %1459 = vmatprep.subr.mxu0 0.0
        %1460 = vmatpush1.msra.mxu0 0.0
        %1461 = vmatprep.subr.mxu0 0.0
        %1462 = vmatpush1.msra.mxu0 0.0
        %1463 = vmatprep.subr.mxu0 0.0
        %1464 = vmatpush1.msra.mxu0 %v1423
        %1465 = vmatprep.subr.mxu0 0.0
        %1466 = vmatpush1.msra.mxu0 %v1422
        %1467 = vmatprep.subr.mxu0 0.0
        %1468 = vmatpush1.msra.mxu0 %v1421
        %1469 = vmatprep.subr.mxu0 0.0
        %1470 = vmatpush1.msra.mxu0 %v1420
        %1471 = vmatprep.subr.mxu0 0.0
        %1472 = vmatpush1.msra.mxu0 %v1419
        %1473 = vmatprep.subr.mxu0 0.0
        %1474 = vmatpush1.msra.mxu0 %v1418
        %1475 = vmatprep.subr.mxu0 0.0
        %1476 = vmatpush1.msra.mxu0 %v1417
        %1477 = vmatprep.subr.mxu0 0.0
        %1478 = vmatpush1.msra.mxu0 %v1416
        %1479 = vmatprep.subr.mxu0 0.0
        %1480 = vmatpush1.msra.mxu0 %v1415
        %1481 = vmatprep.subr.mxu0 0.0
        %1482 = vmatpush2.msra.mxu0 0.0
        %1483 = vmatprep.subr.mxu0 0.0
        %1484 = vmatpush2.msra.mxu0 0.0
        %1485 = vmatprep.subr.mxu0 0.0
        %1486 = vmatpush2.msra.mxu0 0.0
        %1487 = vmatprep.subr.mxu0 0.0
        %1488 = vmatpush2.msra.mxu0 0.0
        %1489 = vmatprep.subr.mxu0 0.0
        %1490 = vmatpush2.msra.mxu0 0.0
        %1491 = vmatprep.subr.mxu0 0.0
        %1492 = vmatpush2.msra.mxu0 0.0
        %1493 = vmatprep.subr.mxu0 0.0
        %1494 = vmatpush2.msra.mxu0 0.0
        %1495 = vmatprep.subr.mxu0 0.0
        %1496 = vmatpush2.msra.mxu0 0.0
        %1497 = vmatprep.subr.mxu0 0.0
        %1498 = vmatpush2.msra.mxu0 0.0
        %1499 = vmatprep.subr.mxu0 0.0
        %1500 = vmatpush2.msra.mxu0 0.0
        %1501 = vmatprep.subr.mxu0 0.0
        %1502 = vmatpush2.msra.mxu0 0.0
        %1503 = vmatprep.subr.mxu0 0.0
        %1504 = vmatpush2.msra.mxu0 0.0
        %1505 = vmatprep.subr.mxu0 0.0
        %1506 = vmatpush2.msra.mxu0 0.0
        %1507 = vmatprep.subr.mxu0 0.0
        %1508 = vmatpush2.msra.mxu0 0.0
        %1509 = vmatprep.subr.mxu0 0.0
        %1510 = vmatpush2.msra.mxu0 0.0
        %1511 = vmatprep.subr.mxu0 0.0
        %1512 = vmatpush2.msra.mxu0 0.0
        %1513 = vmatprep.mubr.f32.mxu0 0.0
        %1514 = vmatmul.mubr.f32.gmra.mxu0 %v1426
        %v1515 = vpop.f32.mrf.mxu0
        %v1516 = vadd.f32 0.0, %v1515
        %v1517 = vpop.f32.mrf.mxu0
        %1518 = vmatprep.mubr.f32.mxu0 0.0
        %1519 = vmatmul.mubr.f32.gmra.mxu0 %v1429
        %v1520 = vpop.f32.mrf.mxu0
        %v1521 = vadd.f32 0.0, %v1520
        %v1522 = vpop.f32.mrf.mxu0
        %1523 = vmatprep.mubr.f32.mxu0 0.0
        %1524 = vmatmul.mubr.f32.gmra.mxu0 %v1432
        %v1525 = vpop.f32.mrf.mxu0
        %v1526 = vadd.f32 0.0, %v1525
        %v1527 = vpop.f32.mrf.mxu0
        %1528 = vmatprep.mubr.f32.mxu0 0.0
        %1529 = vmatmul.mubr.f32.gmra.mxu0 %v1435
        %v1530 = vpop.f32.mrf.mxu0
        %v1531 = vadd.f32 0.0, %v1530
        %v1532 = vpop.f32.mrf.mxu0
        %1533 = vmatprep.mubr.f32.mxu0 0.0
        %1534 = vmatmul.mubr.f32.gmra.mxu0 %v1438
        %v1535 = vpop.f32.mrf.mxu0
        %v1536 = vadd.f32 0.0, %v1535
        %v1537 = vpop.f32.mrf.mxu0
        %1538 = vmatprep.mubr.f32.mxu0 0.0
        %1539 = vmatmul.mubr.f32.gmra.mxu0 %v1441
        %v1540 = vpop.f32.mrf.mxu0
        %v1541 = vadd.f32 0.0, %v1540
        %v1542 = vpop.f32.mrf.mxu0
        %1543 = vmatprep.mubr.f32.mxu0 0.0
        %1544 = vmatmul.mubr.f32.gmra.mxu0 %v1444
        %v1545 = vpop.f32.mrf.mxu0
        %v1546 = vadd.f32 0.0, %v1545
        %v1547 = vpop.f32.mrf.mxu0
        %1548 = vmatprep.mubr.f32.mxu0 0.0
        %1549 = vmatmul.mubr.f32.gmra.mxu0 %v1447
        %v1550 = vpop.f32.mrf.mxu0
        %v1551 = vadd.f32 0.0, %v1550
        %v1552 = vpop.f32.mrf.mxu0
        %1553 = vdwg.mxu0
        %v1554 = vld [vmem:[%s5] sm:$0x1]
        %v1556 = vlaneseq
        %v1557 = vshrl.u32 %v1556, 7
        %v1558 = vsub.s32 0, %v1557
        %v1559 = vrot.slane %v1554, %v1558
        %v1561 = vmul.f32 %v1516, %v1559
        %v1562 = vmul.f32 %v1521, %v1559
        %v1563 = vmul.f32 %v1526, %v1559
        %v1564 = vmul.f32 %v1531, %v1559
        %v1565 = vmul.f32 %v1536, %v1559
        %v1566 = vmul.f32 %v1541, %v1559
        %v1567 = vmul.f32 %v1546, %v1559
        %v1568 = vmul.f32 %v1551, %v1559
        %v1569 = vld [vmem:[%s6] sm:$0x1]
        %v1571 = vlaneseq
        %v1572 = vshrl.u32 %v1571, 7
        %v1573 = vsub.s32 0, %v1572
        %v1574 = vrot.slane %v1569, %v1573
        %v1576 = vadd.f32 %v1561, %v1574
        %v1577 = vadd.f32 %v1562, %v1574
        %v1578 = vadd.f32 %v1563, %v1574
        %v1579 = vadd.f32 %v1564, %v1574
        %v1580 = vadd.f32 %v1565, %v1574
        %v1581 = vadd.f32 %v1566, %v1574
        %v1582 = vadd.f32 %v1567, %v1574
        %v1583 = vadd.f32 %v1568, %v1574
        %v1584 = vmax.f32 %v1576, 0.0
        %v1585 = vmax.f32 %v1577, 0.0
        %v1586 = vmax.f32 %v1578, 0.0
        %v1587 = vmax.f32 %v1579, 0.0
        %v1588 = vmax.f32 %v1580, 0.0
        %v1589 = vmax.f32 %v1581, 0.0
        %v1590 = vmax.f32 %v1582, 0.0
        %v1591 = vmax.f32 %v1583, 0.0
        %1592 = vst [vmem:[%s311] sm:$0xff] %v1584
        %1593 = vst [vmem:[%s311 + $0x8] sm:$0xff] %v1585
        %1594 = vst [vmem:[%s311 + $0x10] sm:$0xff] %v1586
        %1595 = vst [vmem:[%s311 + $0x18] sm:$0xff] %v1587
        %1596 = vst [vmem:[%s311 + $0x20] sm:$0xff] %v1588
        %1597 = vst [vmem:[%s311 + $0x28] sm:$0xff] %v1589
        %1598 = vst [vmem:[%s311 + $0x30] sm:$0xff] %v1590
        %1599 = vst [vmem:[%s311 + $0x38] sm:$0xff] %v1591
        %s1600 = sand.u32 %s185, 1
        %s1601 = scalar_lea.sflag [#allocation6], %s1600
        %s1602 = sand.u32 %s185, 1
        %s1603 = smul.addr %s1602, 64
        %s1604 = scalar_lea.vmem [#allocation9], %s1603
        // Predicated region
        $region57: #{tpu_custom_call.1} parent=47 // pred_check
          %p1605 = pneg %p195
        $region58: #{tpu_custom_call.1} parent=47 // pred_check_branch
          %1607 = sbr.rel (%p1605) target = $region60
        $region59: #{tpu_custom_call.1} parent=47 // pred_region
          %s1609 = ssub.s32 1024, 1024
          %1610 = vsyncadd %s1601, %s1609
          %s1611 = smul.addr %s25, 8
          %s1612 = smul.addr %s1611, 128
          %s1613 = scalar_lea.hbm %s7, %s1612
          %s1614 = sshll.u32 %s1604, 4
          %s1615 = int_to_ptr.vmem [resolvable:$true] %s1614
          %1620 = dma.vmem_to_hbm [thread:$0]  %s1615, 1024, %s1613, %s1601, 128, 128, 8
        $region60: #{tpu_custom_call.1} parent=47 // pred_fallthru
          _
      $region48: #{tpu_custom_call.1} parent=5 // pred_fallthru
        _
      %p1621 = scmp.le.s32.totalorder 2, %s20
      // Predicated region
      $region61: #{tpu_custom_call.1} parent=5 // pred_check
        %p1622 = pneg %p1621
      $region62: #{tpu_custom_call.1} parent=5 // pred_check_branch
        %1624 = sbr.rel (%p1622) target = $region64
      $region63: #{tpu_custom_call.1} parent=5 // pred_region
        %s1625 = ssub.s32 %s20, 2
        // Predicated region
        $region65: #{tpu_custom_call.1} parent=63 // pred_check
          %p1626 = pneg %p201
        $region66: #{tpu_custom_call.1} parent=63 // pred_check_branch
          %1628 = sbr.rel (%p1626) target = $region68
        $region67: #{tpu_custom_call.1} parent=63 // pred_region
          %s1629 = sand.u32 %s186, 1
          %s1630 = scalar_lea.sflag [#allocation6], %s1629
          %s1631 = sand.u32 %s186, 1
          %s1632 = smul.addr %s1631, 64
          %s1633 = scalar_lea.vmem [#allocation9], %s1632
          %1634 = dma.done %s1630, 1024
        $region68: #{tpu_custom_call.1} parent=63 // pred_fallthru
          _
      $region64: #{tpu_custom_call.1} parent=5 // pred_fallthru
        _
    $region6: #{tpu_custom_call.1} parent=1 // loop_footer
      %s24 = sadd.s32 1, %s20
    $region7: #{tpu_custom_call.1} parent=1 // loop_footer_branch
      %19 = sbr.rel target = $region3
    $region8: #{tpu_custom_call.1} parent=1 // loop_exit
      _
    %1635 = vsyncpa [#allocation5], 1
    %s1636 = scalar_lea.sflag [#allocation5], 1
    %1637 = vsyncpa %s1636, 1
    %1638 = vsyncpa [#allocation8], 1
    %1639 = vsyncpa [#allocation6], 1
    %s1640 = scalar_lea.sflag [#allocation6], 1
    %1641 = vsyncpa %s1640, 1

</llo_original>
